<compile_context>
chip_gen: v7x
topology: tpu7x:2x2x1
jax: 0.10.0
libtpu: 0.0.40
codegen_flags: <defaults>
</compile_context>

<pallas_src>
import jax
import jax.numpy as jnp
import numpy as np
from jax.experimental import pallas as pl
from jax.experimental.pallas import tpu as pltpu

# ----------------------------- config (small, lane-friendly) -------------------------
B, S, H = 2, 128, 128       # batch, sequence, hidden_dim   (T = B*S = 256)
I = 256                     # expert intermediate (ffn) dim
E = 8                       # num_experts
TOP_K = 2                   # top_k

T_TILE = 128                # token tile (n_t = 2 -> both v7x TensorCores stay busy)
I_TILE = 256                # ffn contraction tile (>= 256 fills the v6e/v7x MXU depth)

# expert grouping for the wrapper: experts (0, 1) share group 0 (with an unmerge matrix),
# every other expert is its own singleton group (unmerge_matrix = None -> identity).
GROUPED_EXPERTS = (0, 1)

HIGHEST = jax.lax.Precision.HIGHEST


# --------------------------------- Pallas kernel --------------------------------------

def _moe_kernel(flags_ref, eff_ref, x_ref, w13_ref, w2_ref, rw_ref,
                out_ref, acc_ref, rw_col_ref):
    ti = pl.program_id(0)            # token tile               (parallel)
    e = pl.program_id(1)             # expert                   (reduction)
    ii = pl.program_id(2)            # ffn / intermediate tile  (reduction)
    n_e = pl.num_programs(1)
    n_i = pl.num_programs(2)

    k = ti * n_e + e
    live = flags_ref[k] != 0
    first = jnp.logical_and(e == 0, ii == 0)

    # Only needed when the very first (expert, I-tile) block of this token tile is dead;
    # the live path initializes the accumulator itself (no separate zero+add pass).
    @pl.when(jnp.logical_and(first, jnp.logical_not(live)))
    def _zero_acc():
        acc_ref[...] = jnp.zeros_like(acc_ref)

    @pl.when(live)
    def _compute():
        # Routing-weight column depends only on (ti, e): extract once per expert
        # (ii == 0) from the resident lane-dense (T_TILE, E) tile into VMEM scratch.
        @pl.when(ii == 0)
        def _extract_rw():
            rw = rw_ref[...]                                    # (T_TILE, E) f32
            lane = jax.lax.broadcasted_iota(jnp.int32, rw.shape, 1)
            rw_col_ref[...] = jnp.sum(jnp.where(lane == e, rw, 0.0),
                                      axis=1, keepdims=True)    # (T_TILE, 1)

        x = x_ref[...]                      # (T_TILE, H)         bf16 in production
        w13 = w13_ref[0, 0]                 # (H, 2*I_TILE) = [w1 tile | w3 tile]
        w2 = w2_ref[0, 0]                   # (I_TILE, H)   (unmerge already folded in)

        gu = jnp.dot(x, w13, preferred_element_type=jnp.float32)    # (T_TILE, 2*I_TILE)
        half = gu.shape[1] // 2
        g = gu[:, :half]
        u = gu[:, half:]
        h = (g * jax.nn.sigmoid(g)) * u                             # SiLU(w1 x)*(w3 x), f32
        # cast only for the matmul (bf16 halves vreg/VMEM pressure on v6e/v7x; on the f32
        # path this is a no-op and the elementwise math stays f32 for v5e's VPU).
        y = jnp.dot(h.astype(w2.dtype), w2,
                    preferred_element_type=jnp.float32)             # (T_TILE, H) partial

        contrib = rw_col_ref[...] * y

        @pl.when(first)
        def _init():
            acc_ref[...] = contrib

        @pl.when(jnp.logical_not(first))
        def _accum():
            acc_ref[...] += contrib

    @pl.when(jnp.logical_and(e == n_e - 1, ii == n_i - 1))
    def _store():
        out_ref[...] = acc_ref[...].astype(out_ref.dtype)


def moe_experts(x_flat, w13_t, w2eff_t, dense_rw, flags, eff_e):
    T, Hd = x_flat.shape
    n_exp, n_i, i_tile, _ = w2eff_t.shape
    n_t = T // T_TILE

    # Flag-dependent weight index_map: for a dead (token-tile, expert) block, return the
    # block index of the last LIVE block in grid order -> identical to the previous grid
    # step's index -> Pallas elides the weight DMA (not just the MXU work).
    def weight_map(ti, e, ii, flags, eff):
        k = ti * n_exp + e
        live = flags[k]
        bi = ii * live + (n_i - 1) * (1 - live)
        return (eff[k], bi, 0, 0)

    return pl.pallas_call(
        _moe_kernel,
        out_shape=jax.ShapeDtypeStruct((T, Hd), x_flat.dtype),
        grid_spec=pltpu.PrefetchScalarGridSpec(
            num_scalar_prefetch=2,
            grid=(n_t, n_exp, n_i),
            in_specs=[
                pl.BlockSpec((T_TILE, Hd), lambda ti, e, ii, flags, eff: (ti, 0)),
                pl.BlockSpec((1, 1, Hd, 2 * i_tile), weight_map),
                pl.BlockSpec((1, 1, i_tile, Hd), weight_map),
                pl.BlockSpec((T_TILE, n_exp), lambda ti, e, ii, flags, eff: (ti, 0)),
            ],
            out_specs=pl.BlockSpec((T_TILE, Hd), lambda ti, e, ii, flags, eff: (ti, 0)),
            scratch_shapes=[pltpu.VMEM((T_TILE, Hd), jnp.float32),   # f32 accumulator
                            pltpu.VMEM((T_TILE, 1), jnp.float32)],   # routing column
        ),
        compiler_params=pltpu.CompilerParams(
            dimension_semantics=("parallel", "arbitrary", "arbitrary"),
            vmem_limit_bytes=32 * 1024 * 1024,
        ),
    )(flags, eff_e, x_flat, w13_t, w2eff_t, dense_rw)


# ----------------------------- offline parameter repack --------------------------------

def prepare_moe_params(w1, w3, w2, post, dtype):
    """One-time repack of PyTorch-style expert weights into kernel layouts."""
    n_exp, Id, Hd = w1.shape
    n_i = Id // I_TILE
    w1_t = jnp.swapaxes(w1, 1, 2).reshape(n_exp, Hd, n_i, I_TILE)
    w3_t = jnp.swapaxes(w3, 1, 2).reshape(n_exp, Hd, n_i, I_TILE)
    # (E, n_i, H, 2*I_TILE): I-tile index leading -> each kernel block is one contiguous DMA.
    w13_t = jnp.transpose(jnp.concatenate([w1_t, w3_t], axis=-1), (0, 2, 1, 3))
    # Fold the unmerge/identity post matrix into the down projection (f32, HIGHEST):
    #   (h @ w2^T) @ post == h @ (w2^T @ post)
    w2eff = jnp.einsum("ehi,ehg->eig", w2, post, precision=HIGHEST)      # (E, I, H)
    w2eff_t = w2eff.reshape(n_exp, n_i, I_TILE, Hd)                      # (E, n_i, I_TILE, H)
    return w13_t.astype(dtype), w2eff_t.astype(dtype)


# --------------------------------- forward wrapper -------------------------------------

def _routing(x_flat, wg):
    """Router logits + dense renormalized top-k routing weights (f32)."""
    n_exp = wg.shape[0]
    logits = jnp.dot(x_flat, wg.T, precision=HIGHEST)                   # (T, E), x dtype
    probs = jax.nn.softmax(logits.astype(jnp.float32), axis=-1)
    top_w, top_idx = jax.lax.top_k(probs, TOP_K)
    top_w = top_w / jnp.sum(top_w, axis=-1, keepdims=True)
    # Dense per-(token, expert) weight, 0 where not selected; kept f32 so the per-token
    # scale is not double-rounded on the bf16 path.
    one_hot = jax.nn.one_hot(top_idx, n_exp, dtype=jnp.float32)         # (T, K, E)
    dense_rw = jnp.einsum("tk,tke->te", top_w, one_hot)                 # (T, E) f32
    return logits, dense_rw


def moe_wrapper_forward(hidden_states, wg, w13_t, w2eff_t):
    """Replicates MoEWrapper.forward (eval mode: no jitter noise)."""
    Bd, Sd, Hd = hidden_states.shape
    x_flat = hidden_states.reshape(-1, Hd)                              # (T, H)
    T = x_flat.shape[0]
    n_exp = wg.shape[0]
    n_t = T // T_TILE

    # Router stays in XLA: a (T,H)x(H,E) matmul in its own pallas_call is pure overhead.
    router_logits, dense_rw = _routing(x_flat, wg)

    # Per-(token-tile, expert) liveness flag + "effective expert" table (index of the last
    # live expert in grid order). Both are scalar-prefetched into SMEM: flags gate the
    # compute, eff_e lets the weight index_maps skip DMAs for dead blocks.
    flags2d = jnp.max(dense_rw.reshape(n_t, T_TILE, n_exp), axis=1) > 0.0
    flags = flags2d.astype(jnp.int32).reshape(-1)                       # (n_t * E,)
    pos = jnp.arange(n_t * n_exp, dtype=jnp.int32)
    last_live = jax.lax.cummax(jnp.where(flags > 0, pos, -1), axis=0)
    eff_e = jnp.where(last_live >= 0, last_live % n_exp, 0).astype(jnp.int32)

    out = moe_experts(x_flat, w13_t, w2eff_t, dense_rw, flags, eff_e)   # (T, H)
    return out.reshape(Bd, Sd, Hd), router_logits


# ----------------------------------- reference -----------------------------------------

def reference_forward(hidden_states, wg, w1, w3, w2, post):
    """Pure-JAX reference mirroring the PyTorch module (unfused, unfolded f32 weights)."""
    Bd, Sd, Hd = hidden_states.shape
    x = hidden_states.reshape(-1, Hd)
    logits, dense_rw = _routing(x, wg)
    xf = x.astype(jnp.float32)
    out = jnp.zeros((xf.shape[0], Hd), jnp.float32)
    for e in range(w1.shape[0]):
        g = jnp.dot(xf, w1[e].T, precision=HIGHEST)
        u = jnp.dot(xf, w3[e].T, precision=HIGHEST)
        y = jnp.dot((g * jax.nn.sigmoid(g)) * u, w2[e].T, precision=HIGHEST)
        y = jnp.dot(y, post[e], precision=HIGHEST)
        out = out + y * dense_rw[:, e:e + 1]
    return out.reshape(Bd, Sd, Hd), logits


# ------------------------------------- main ---------------------------------------------

if __name__ == "__main__":
    key = jax.random.PRNGKey(0)
    k_x, k_g, k_w1, k_w3, k_w2, k_u = jax.random.split(key, 6)

    hidden_f32 = jax.random.normal(k_x, (B, S, H), dtype=jnp.float32)

    # parameters (deterministic, PyTorch-Linear style (out, in)):
    wg_f32 = jax.random.normal(k_g, (E, H), dtype=jnp.float32) * (1.0 / np.sqrt(H))
    w1 = jax.random.normal(k_w1, (E, I, H), dtype=jnp.float32) * (1.0 / np.sqrt(H))
    w3 = jax.random.normal(k_w3, (E, I, H), dtype=jnp.float32) * (1.0 / np.sqrt(H))
    w2 = jax.random.normal(k_w2, (E, H, I), dtype=jnp.float32) * (1.0 / np.sqrt(I))

    # wrapper state: group 0 = experts (0, 1) with an unmerge matrix of shape (H, 2*H);
    # all remaining experts are singleton groups with unmerge_matrix = None -> identity.
    unmerge_g0 = jax.random.normal(
        k_u, (H, len(GROUPED_EXPERTS) * H), dtype=jnp.float32) * 0.1
    post = jnp.tile(jnp.eye(H, dtype=jnp.float32)[None], (E, 1, 1))
    for gi, ge in enumerate(GROUPED_EXPERTS):
        post = post.at[ge].set(unmerge_g0[:, gi * H:(gi + 1) * H])

    fwd = jax.jit(moe_wrapper_forward)

    # --- production path: bf16 activations/weights, f32 MXU accumulation --------------
    hidden_bf16 = hidden_f32.astype(jnp.bfloat16)
    wg_bf16 = wg_f32.astype(jnp.bfloat16)
    w13_bf16, w2eff_bf16 = prepare_moe_params(w1, w3, w2, post, jnp.bfloat16)
    out_bf16, logits_bf16 = jax.block_until_ready(
        fwd(hidden_bf16, wg_bf16, w13_bf16, w2eff_bf16))
    # Reference shares the identical (bf16-input) routing but uses f32 expert weights, so
    # the comparison measures only bf16 rounding of the expert compute, not top-k flips.
    ref_out_b, ref_logits_b = reference_forward(hidden_bf16, wg_bf16, w1, w3, w2, post)
    assert out_bf16.shape == (B, S, H) and logits_bf16.shape == (B * S, E)
    assert out_bf16.dtype == jnp.bfloat16
    np.testing.assert_allclose(np.asarray(logits_bf16.astype(jnp.float32)),
                               np.asarray(ref_logits_b.astype(jnp.float32)),
                               rtol=2e-2, atol=2e-2)
    np.testing.assert_allclose(np.asarray(out_bf16.astype(jnp.float32)),
                               np.asarray(ref_out_b), rtol=5e-2, atol=5e-2)

    # --- f32 path: tight semantic check against the module reference ------------------
    w13_f32, w2eff_f32 = prepare_moe_params(w1, w3, w2, post, jnp.float32)
    out_f32, logits_f32 = jax.block_until_ready(
        fwd(hidden_f32, wg_f32, w13_f32, w2eff_f32))
    ref_out_f, ref_logits_f = reference_forward(hidden_f32, wg_f32, w1, w3, w2, post)
    assert out_f32.shape == (B, S, H) and logits_f32.shape == (B * S, E)
    np.testing.assert_allclose(np.asarray(logits_f32), np.asarray(ref_logits_f),
                               rtol=1e-3, atol=1e-3)
    # tolerance covers default-precision MXU f32 passes vs the HIGHEST-precision reference
    np.testing.assert_allclose(np.asarray(out_f32), np.asarray(ref_out_f),
                               rtol=2e-2, atol=2e-2)

    print("KERNEL_OK")
</pallas_src>

<mosaic_0001>
module attributes {stable_mosaic.version = 11 : i64} {
  func.func @_moe_kernel(%arg0: i32, %arg1: i32, %arg2: i32, %arg3: memref<16xi32, #tpu.memory_space<smem>>, %arg4: memref<16xi32, #tpu.memory_space<smem>>, %arg5: memref<128x128xbf16, #tpu.memory_space<vmem>>, %arg6: memref<1x1x128x512xbf16, #tpu.memory_space<vmem>>, %arg7: memref<1x1x256x128xbf16, #tpu.memory_space<vmem>>, %arg8: memref<128x8xf32, #tpu.memory_space<vmem>>, %arg9: memref<128x128xbf16, #tpu.memory_space<vmem>>, %arg10: memref<128x128xf32, #tpu.memory_space<vmem>>, %arg11: memref<128x1xf32, #tpu.memory_space<vmem>>) attributes {dimension_semantics = [#tpu.dimension_semantics<parallel>, #tpu.dimension_semantics<arbitrary>, #tpu.dimension_semantics<arbitrary>], iteration_bounds = array<i64: 2, 8, 1>, scalar_prefetch = 2 : i64, scratch_operands = 2 : i64, tpu.core_type = #tpu.core_type<tc>, window_params = [{transform_indices = @transform_0, window_bounds = array<i64: 128, 128>}, {transform_indices = @transform_1, window_bounds = array<i64: 1, 1, 128, 512>}, {transform_indices = @transform_2, window_bounds = array<i64: 1, 1, 256, 128>}, {transform_indices = @transform_3, window_bounds = array<i64: 128, 8>}, {transform_indices = @transform_4, window_bounds = array<i64: 128, 128>}]} {
    %c8_i32 = arith.constant 8 : i32
    %0 = arith.muli %arg0, %c8_i32 : i32
    %1 = arith.addi %0, %arg1 : i32
    %2 = arith.index_cast %1 : i32 to index
    %3 = memref.load %arg3[%2] : memref<16xi32, #tpu.memory_space<smem>>
    %c0_i32 = arith.constant 0 : i32
    %4 = arith.cmpi ne, %3, %c0_i32 : i32
    %c0_i32_0 = arith.constant 0 : i32
    %5 = arith.cmpi eq, %arg1, %c0_i32_0 : i32
    %c0_i32_1 = arith.constant 0 : i32
    %6 = arith.cmpi eq, %arg2, %c0_i32_1 : i32
    %7 = arith.andi %5, %6 : i1
    %true = arith.constant true
    %8 = arith.xori %4, %true : i1
    %9 = arith.andi %7, %8 : i1
    %10 = arith.extui %9 : i1 to i32
    %c0_i32_2 = arith.constant 0 : i32
    %11 = arith.cmpi ne, %10, %c0_i32_2 : i32
    scf.if %11 {
      %cst = arith.constant 0.000000e+00 : f32
      %19 = vector.broadcast %cst : f32 to vector<128x128xf32>
      %c0 = arith.constant 0 : index
      %c0_6 = arith.constant 0 : index
      %20 = vector.load %arg10[%c0, %c0_6] : memref<128x128xf32, #tpu.memory_space<vmem>>, vector<128x128xf32>
      tpu.vector_store %arg10[%c0, %c0_6], %19 {strides = array<i32>} : memref<128x128xf32, #tpu.memory_space<vmem>>, vector<128x128xf32>,
    } else {
    }
    %12 = arith.extui %4 : i1 to i32
    %c0_i32_3 = arith.constant 0 : i32
    %13 = arith.cmpi ne, %12, %c0_i32_3 : i32
    scf.if %13 {
      %c0_i32_6 = arith.constant 0 : i32
      %19 = arith.cmpi eq, %arg2, %c0_i32_6 : i32
      %20 = arith.extui %19 : i1 to i32
      %c0_i32_7 = arith.constant 0 : i32
      %21 = arith.cmpi ne, %20, %c0_i32_7 : i32
      scf.if %21 {
        %c0_24 = arith.constant 0 : index
        %c0_25 = arith.constant 0 : index
        %47 = vector.load %arg8[%c0_24, %c0_25] : memref<128x8xf32, #tpu.memory_space<vmem>>, vector<128x8xf32>
        %48 = tpu.iota {dimensions = array<i32: 1>} : vector<128x8xi32>
        %49 = vector.broadcast %arg1 : i32 to vector<128x8xi32>
        %50 = arith.cmpi eq, %48, %49 : vector<128x8xi32>
        %cst_26 = arith.constant 0.000000e+00 : f32
        %51 = vector.broadcast %cst_26 : f32 to vector<128x8xf32>
        %52 = arith.select %50, %47, %51 : vector<128x8xi1>, vector<128x8xf32>
        %cst_27 = arith.constant dense<0.000000e+00> : vector<128xf32>
        %53 = vector.multi_reduction <add>, %52, %cst_27 [1] : vector<128x8xf32> to vector<128xf32>
        %54 = vector.shape_cast %53 : vector<128xf32> to vector<128x1xf32>
        %c0_28 = arith.constant 0 : index
        %c0_29 = arith.constant 0 : index
        %55 = vector.load %arg11[%c0_28, %c0_29] : memref<128x1xf32, #tpu.memory_space<vmem>>, vector<128x1xf32>
        tpu.vector_store %arg11[%c0_28, %c0_29], %54 {strides = array<i32>} : memref<128x1xf32, #tpu.memory_space<vmem>>, vector<128x1xf32>,
      } else {
      }
      %c0 = arith.constant 0 : index
      %c0_8 = arith.constant 0 : index
      %22 = vector.load %arg5[%c0, %c0_8] : memref<128x128xbf16, #tpu.memory_space<vmem>>, vector<128x128xbf16>
      %c0_9 = arith.constant 0 : index
      %c0_10 = arith.constant 0 : index
      %c0_11 = arith.constant 0 : index
      %c0_12 = arith.constant 0 : index
      %23 = vector.load %arg6[%c0_9, %c0_10, %c0_11, %c0_12] : memref<1x1x128x512xbf16, #tpu.memory_space<vmem>>, vector<1x1x128x512xbf16>
      %24 = vector.shape_cast %23 : vector<1x1x128x512xbf16> to vector<128x512xbf16>
      %c0_13 = arith.constant 0 : index
      %c0_14 = arith.constant 0 : index
      %c0_15 = arith.constant 0 : index
      %c0_16 = arith.constant 0 : index
      %25 = vector.load %arg7[%c0_13, %c0_14, %c0_15, %c0_16] : memref<1x1x256x128xbf16, #tpu.memory_space<vmem>>, vector<1x1x256x128xbf16>
      %26 = vector.shape_cast %25 : vector<1x1x256x128xbf16> to vector<256x128xbf16>
      %cst = arith.constant dense<0.000000e+00> : vector<128x512xf32>
      %27 = tpu.matmul %22, %24, %cst {dimension_numbers = #tpu.dot_dimension_numbers<[1], [0], [0], [1], [0, 0, 1, 1], [], []>} : vector<128x128xbf16>, vector<128x512xbf16>, vector<128x512xf32> -> vector<128x512xf32>
      %28 = vector.extract_strided_slice %27 {offsets = [0, 0], sizes = [128, 256], strides = [1, 1]} : vector<128x512xf32> to vector<128x256xf32>
      %29 = vector.extract_strided_slice %27 {offsets = [0, 256], sizes = [128, 256], strides = [1, 1]} : vector<128x512xf32> to vector<128x256xf32>
      %30 = arith.negf %28 : vector<128x256xf32>
      %31 = math.exp %30 : vector<128x256xf32>
      %cst_17 = arith.constant 1.000000e+00 : f32
      %32 = vector.broadcast %cst_17 : f32 to vector<128x256xf32>
      %33 = arith.addf %32, %31 : vector<128x256xf32>
      %34 = arith.divf %32, %33 : vector<128x256xf32>
      %35 = arith.mulf %28, %34 : vector<128x256xf32>
      %36 = arith.mulf %35, %29 : vector<128x256xf32>
      %37 = arith.truncf %36 : vector<128x256xf32> to vector<128x256xbf16>
      %cst_18 = arith.constant dense<0.000000e+00> : vector<128x128xf32>
      %38 = tpu.matmul %37, %26, %cst_18 {dimension_numbers = #tpu.dot_dimension_numbers<[1], [0], [0], [1], [0, 0, 1, 1], [], []>} : vector<128x256xbf16>, vector<256x128xbf16>, vector<128x128xf32> -> vector<128x128xf32>
      %c0_19 = arith.constant 0 : index
      %c0_20 = arith.constant 0 : index
      %39 = vector.load %arg11[%c0_19, %c0_20] : memref<128x1xf32, #tpu.memory_space<vmem>>, vector<128x1xf32>
      %40 = vector.broadcast %39 : vector<128x1xf32> to vector<128x128xf32>
      %41 = arith.mulf %40, %38 : vector<128x128xf32>
      %42 = arith.extui %7 : i1 to i32
      %c0_i32_21 = arith.constant 0 : i32
      %43 = arith.cmpi ne, %42, %c0_i32_21 : i32
      scf.if %43 {
        %c0_24 = arith.constant 0 : index
        %c0_25 = arith.constant 0 : index
        %47 = vector.load %arg10[%c0_24, %c0_25] : memref<128x128xf32, #tpu.memory_space<vmem>>, vector<128x128xf32>
        tpu.vector_store %arg10[%c0_24, %c0_25], %41 {strides = array<i32>} : memref<128x128xf32, #tpu.memory_space<vmem>>, vector<128x128xf32>,
      } else {
      }
      %true_22 = arith.constant true
      %44 = arith.xori %7, %true_22 : i1
      %45 = arith.extui %44 : i1 to i32
      %c0_i32_23 = arith.constant 0 : i32
      %46 = arith.cmpi ne, %45, %c0_i32_23 : i32
      scf.if %46 {
        %c0_24 = arith.constant 0 : index
        %c0_25 = arith.constant 0 : index
        %47 = vector.load %arg10[%c0_24, %c0_25] : memref<128x128xf32, #tpu.memory_space<vmem>>, vector<128x128xf32>
        %48 = arith.addf %47, %41 : vector<128x128xf32>
        %c0_26 = arith.constant 0 : index
        %c0_27 = arith.constant 0 : index
        %49 = vector.load %arg10[%c0_26, %c0_27] : memref<128x128xf32, #tpu.memory_space<vmem>>, vector<128x128xf32>
        tpu.vector_store %arg10[%c0_26, %c0_27], %48 {strides = array<i32>} : memref<128x128xf32, #tpu.memory_space<vmem>>, vector<128x128xf32>,
      } else {
      }
    } else {
    }
    %c7_i32 = arith.constant 7 : i32
    %14 = arith.cmpi eq, %arg1, %c7_i32 : i32
    %c0_i32_4 = arith.constant 0 : i32
    %15 = arith.cmpi eq, %arg2, %c0_i32_4 : i32
    %16 = arith.andi %14, %15 : i1
    %17 = arith.extui %16 : i1 to i32
    %c0_i32_5 = arith.constant 0 : i32
    %18 = arith.cmpi ne, %17, %c0_i32_5 : i32
    scf.if %18 {
      %c0 = arith.constant 0 : index
      %c0_6 = arith.constant 0 : index
      %19 = vector.load %arg10[%c0, %c0_6] : memref<128x128xf32, #tpu.memory_space<vmem>>, vector<128x128xf32>
      %20 = arith.truncf %19 : vector<128x128xf32> to vector<128x128xbf16>
      %c0_7 = arith.constant 0 : index
      %c0_8 = arith.constant 0 : index
      %21 = vector.load %arg9[%c0_7, %c0_8] : memref<128x128xbf16, #tpu.memory_space<vmem>>, vector<128x128xbf16>
      tpu.vector_store %arg9[%c0_7, %c0_8], %20 {strides = array<i32>} : memref<128x128xbf16, #tpu.memory_space<vmem>>, vector<128x128xbf16>,
    } else {
    }
    return
  }
  func.func @transform_0(%arg0: i32, %arg1: i32, %arg2: i32, %arg3: memref<16xi32, #tpu.memory_space<smem>>, %arg4: memref<16xi32, #tpu.memory_space<smem>>) -> (i32, i32) {
    %c0_i32 = arith.constant 0 : i32
    %c0_i32_0 = arith.constant 0 : i32
    return %arg0, %c0_i32 : i32, i32
  }
  func.func @transform_1(%arg0: i32, %arg1: i32, %arg2: i32, %arg3: memref<16xi32, #tpu.memory_space<smem>>, %arg4: memref<16xi32, #tpu.memory_space<smem>>) -> (i32, i32, i32, i32) {
    %c8_i32 = arith.constant 8 : i32
    %0 = arith.muli %arg0, %c8_i32 : i32
    %1 = arith.addi %0, %arg1 : i32
    %2 = arith.index_cast %1 : i32 to index
    %3 = memref.load %arg3[%2] : memref<16xi32, #tpu.memory_space<smem>>
    %4 = arith.muli %arg2, %3 : i32
    %c1_i32 = arith.constant 1 : i32
    %5 = arith.subi %c1_i32, %3 : i32
    %c0_i32 = arith.constant 0 : i32
    %6 = arith.muli %c0_i32, %5 : i32
    %7 = arith.addi %4, %6 : i32
    %8 = arith.index_cast %1 : i32 to index
    %9 = memref.load %arg4[%8] : memref<16xi32, #tpu.memory_space<smem>>
    %c0_i32_0 = arith.constant 0 : i32
    %c0_i32_1 = arith.constant 0 : i32
    %c0_i32_2 = arith.constant 0 : i32
    return %9, %7, %c0_i32_0, %c0_i32_1 : i32, i32, i32, i32
  }
  func.func @transform_2(%arg0: i32, %arg1: i32, %arg2: i32, %arg3: memref<16xi32, #tpu.memory_space<smem>>, %arg4: memref<16xi32, #tpu.memory_space<smem>>) -> (i32, i32, i32, i32) {
    %c8_i32 = arith.constant 8 : i32
    %0 = arith.muli %arg0, %c8_i32 : i32
    %1 = arith.addi %0, %arg1 : i32
    %2 = arith.index_cast %1 : i32 to index
    %3 = memref.load %arg3[%2] : memref<16xi32, #tpu.memory_space<smem>>
    %4 = arith.muli %arg2, %3 : i32
    %c1_i32 = arith.constant 1 : i32
    %5 = arith.subi %c1_i32, %3 : i32
    %c0_i32 = arith.constant 0 : i32
    %6 = arith.muli %c0_i32, %5 : i32
    %7 = arith.addi %4, %6 : i32
    %8 = arith.index_cast %1 : i32 to index
    %9 = memref.load %arg4[%8] : memref<16xi32, #tpu.memory_space<smem>>
    %c0_i32_0 = arith.constant 0 : i32
    %c0_i32_1 = arith.constant 0 : i32
    %c0_i32_2 = arith.constant 0 : i32
    return %9, %7, %c0_i32_0, %c0_i32_1 : i32, i32, i32, i32
  }
  func.func @transform_3(%arg0: i32, %arg1: i32, %arg2: i32, %arg3: memref<16xi32, #tpu.memory_space<smem>>, %arg4: memref<16xi32, #tpu.memory_space<smem>>) -> (i32, i32) {
    %c0_i32 = arith.constant 0 : i32
    %c0_i32_0 = arith.constant 0 : i32
    return %arg0, %c0_i32 : i32, i32
  }
  func.func @transform_4(%arg0: i32, %arg1: i32, %arg2: i32, %arg3: memref<16xi32, #tpu.memory_space<smem>>, %arg4: memref<16xi32, #tpu.memory_space<smem>>) -> (i32, i32) {
    %c0_i32 = arith.constant 0 : i32
    %c0_i32_0 = arith.constant 0 : i32
    return %arg0, %c0_i32 : i32, i32
  }
}

</mosaic_0001>

<llo_original>
// kernel: moe_wrapper_forward.1
$region0: #{moe_wrapper_forward.1}
  #allocation0 [shape = 'u32[]', space=smem, size = 0x4, offset = 0x4, fixed_abs, tag = 'smem constant byte address 0x4 - core index']
  #allocation1 [shape = 'u32[144,128]{1,0:T(1,128)}', space=vmem, size = 0x12000, scoped, tag = 'internal scratch']
  #allocation2 [shape = 'f32[128,128]{1,0:T(8,128)}', space=vmem, size = 0x10000, scoped, tag = 'scratch operand']
  #allocation3 [shape = 'f32[128,1]{1,0:T(8,128)}', space=vmem, size = 0x10000, scoped, tag = 'scratch operand']
  #allocation4 [shape = 's32[1]{0}', space=sflag, size = 0x4, scoped, tag = 'scoped memory for moe_wrapper_forward.1']
  #allocation5 [shape = 'u8[512]{0}', space=smem, size = 0x200, scoped, tag = 'prefetched SMEM operand 0']
  #allocation6 [shape = 'u8[512]{0}', space=smem, size = 0x200, scoped, tag = 'prefetched SMEM operand 1']
  %s0 = inlined_call_operand.vmem [shape: s32[16], index: 0, kind: input, shape index: {}]
  %s1 = inlined_call_operand.vmem [shape: s32[16], index: 1, kind: input, shape index: {}]
  %s2 = inlined_call_operand.vmem [shape: bf16[256,128], index: 2, kind: input, shape index: {}]
  %s3 = inlined_call_operand.hbm [shape: bf16[8,1,128,512], index: 3, kind: input, shape index: {}]
  %s4 = inlined_call_operand.hbm [shape: bf16[8,1,256,128], index: 4, kind: input, shape index: {}]
  %s5 = inlined_call_operand.vmem [shape: f32[256,8], index: 5, kind: input, shape index: {}]
  %s6 = inlined_call_operand.hbm [shape: bf16[256,128], index: 6, kind: output, shape index: {}]
  %s7 = sld [smem:[#allocation0]]
  $region81: #{moe_wrapper_forward.1} parent=0
    _
  %s9 = ssub.s32 1, %s7
  %s10 = scalar_select 0, %s9, %s7
  %s11 = sshll.u32 %s0, 4
  %s12 = int_to_ptr.vmem [resolvable:$true] %s11
  %14 = dma.vmem_to_smem %s12, 16, [#allocation5], [#allocation4]
  %s15 = sshll.u32 %s1, 4
  %s16 = int_to_ptr.vmem [resolvable:$true] %s15
  %18 = dma.vmem_to_smem %s16, 16, [#allocation6], [#allocation4]
  %19 = dma.done [#allocation4], 32
  %20 = sfence
  $region1: #{moe_wrapper_forward.1} parent=0
    #allocation7 [shape = 'u8[262144]{0}', space=vmem, size = 0x40000, scoped, tag = 'input window, operand 3']
    #allocation8 [shape = 's32[2]{0}', space=sflag, size = 0x8, scoped, tag = 'scoped memory for moe_wrapper_forward.1']
    #allocation9 [shape = 's32[2]{0}', space=sflag, size = 0x8, scoped, tag = 'scoped memory for moe_wrapper_forward.1']
    #allocation10 [shape = 'u8[131072]{0}', space=vmem, size = 0x20000, scoped, tag = 'input window, operand 4']
    #allocation11 [shape = 's32[2]{0}', space=sflag, size = 0x8, scoped, tag = 'scoped memory for moe_wrapper_forward.1']
    #allocation12 [shape = 'u8[65536]{0}', space=vmem, size = 0x10000, scoped, tag = 'output window, operand 0']
    %21 = vsyncpa [#allocation8], 0
    %s22 = scalar_lea.sflag [#allocation8], 1
    %23 = vsyncpa %s22, 0
    %24 = vsyncpa [#allocation11], 0
    %s25 = scalar_lea.sflag [#allocation11], 1
    %26 = vsyncpa %s25, 0
    %27 = vsyncpa [#allocation9], 0
    %s28 = scalar_lea.sflag [#allocation9], 1
    %29 = vsyncpa %s28, 0
    loop: start=0, step=1, limit=18
    $region2: #{moe_wrapper_forward.1} parent=1 // loop_pre_header
      _
    $region3: #{moe_wrapper_forward.1} parent=1 // loop_header
      %s31 = sphi 0, %s35
      %p32 = scmp.ge.s32.totalorder %s31, 18
      %s38 = sphi 0, %s57
      %s39 = sphi 0, %s53
      %s40 = sphi 0, %s49
      %s41 = sphi 0, %s38
      %s42 = sphi 0, %s39
      %s43 = sphi 0, %s40
      %s44 = sphi 0, %s41
      %s45 = sphi 0, %s42
      %s46 = sphi 0, %s43
      %s60 = sphi 0, %s62
      %s63 = sphi 0, %s60
      %s64 = sphi 0, %s63
      %s80 = sphi 0, %s64
      %s98 = sphi 0, %s100
      %s101 = sphi 0, %s98
      %s102 = sphi 0, %s101
      %s118 = sphi 0, %s102
      %s136 = sphi 0, %s138
      %s139 = sphi 0, %s136
      %s140 = sphi 0, %s139
      %s156 = sphi 0, %s140
      %s162 = sphi 0, %s164
      %s165 = sphi 0, %s162
      %s166 = sphi 0, %s165
      %s182 = sphi 0, %s166
      %s188 = sphi 0, %s190
      %s191 = sphi 0, %s188
      %s192 = sphi 0, %s191
      %s208 = sphi 0, %s192
    $region4: #{moe_wrapper_forward.1} parent=1 // loop_header_branch
      %34 = sbr.rel (%p32) target = $region8
    $region5: #{moe_wrapper_forward.1} parent=1 // loop_body
      %s36 = ssub.s32 %s31, 1
      %s37 = ssub.s32 %s31, 2
      %s47 = sadd.s32 1, %s40
      %p48 = scmp.ge.s32.totalorder %s47, 1
      %s49 = scalar_select %p48, 0, %s47
      %s50 = sadd.s32 1, %s39
      %s51 = scalar_select %p48, %s50, %s39
      %p52 = scmp.ge.s32.totalorder %s51, 8
      %s53 = scalar_select %p52, 0, %s51
      %s54 = sadd.s32 1, %s38
      %s55 = scalar_select %p52, %s54, %s38
      %p56 = scmp.ge.s32.totalorder %s55, 2
      %s57 = scalar_select %p56, 0, %s55
      %s58 = ssub.s32 %s38, %s57
      %p59 = scmp.eq.s32.totalorder %s58, 0
      %s61 = sadd.s32 %s60, 1
      %s62 = scalar_select %p59, %s60, %s61
      %p65 = pneg %p59
      %p66 = scmp.eq.s32.totalorder %s31, 15
      %p67 = por %p65, %p66
      %p68 = scmp.ne.s32.totalorder %s60, %s63
      %p69 = scmp.eq.s32.totalorder %s31, 0
      %p70 = por %p68, %p69
      %p71 = scmp.ne.s32.totalorder %s60, %s63
      %p72 = scmp.eq.s32.totalorder %s36, 15
      %p73 = por %p71, %p72
      %p74 = scmp.ne.s32.totalorder %s63, %s64
      %p75 = scmp.eq.s32.totalorder %s36, 0
      %p76 = por %p74, %p75
      %p77 = scmp.ne.s32.totalorder %s63, %s64
      %p78 = scmp.eq.s32.totalorder %s37, 15
      %p79 = por %p77, %p78
      %p81 = scmp.ne.s32.totalorder %s64, %s80
      %p82 = scmp.eq.s32.totalorder %s37, 0
      %p83 = por %p81, %p82
      %s84 = smul.u32 %s38, 8
      %s85 = sadd.s32 %s84, %s39
      %s86 = sld [smem:[#allocation5 + %s85]]
      %s87 = smul.u32 %s40, %s86
      %s88 = sld [smem:[#allocation6 + %s85]]
      %s89 = smul.u32 %s57, 8
      %s90 = sadd.s32 %s89, %s53
      %s91 = sld [smem:[#allocation5 + %s90]]
      %s92 = smul.u32 %s49, %s91
      %s93 = sld [smem:[#allocation6 + %s90]]
      %s94 = ssub.s32 %s88, %s93
      %s95 = ssub.s32 %s87, %s92
      %s96 = sor.u32 %s94, %s95
      %p97 = scmp.eq.s32.totalorder %s96, 0
      %s99 = sadd.s32 %s98, 1
      %s100 = scalar_select %p97, %s98, %s99
      %p103 = pneg %p97
      %p104 = scmp.eq.s32.totalorder %s31, 15
      %p105 = por %p103, %p104
      %p106 = scmp.ne.s32.totalorder %s98, %s101
      %p107 = scmp.eq.s32.totalorder %s31, 0
      %p108 = por %p106, %p107
      %p109 = scmp.ne.s32.totalorder %s98, %s101
      %p110 = scmp.eq.s32.totalorder %s36, 15
      %p111 = por %p109, %p110
      %p112 = scmp.ne.s32.totalorder %s101, %s102
      %p113 = scmp.eq.s32.totalorder %s36, 0
      %p114 = por %p112, %p113
      %p115 = scmp.ne.s32.totalorder %s101, %s102
      %p116 = scmp.eq.s32.totalorder %s37, 15
      %p117 = por %p115, %p116
      %p119 = scmp.ne.s32.totalorder %s102, %s118
      %p120 = scmp.eq.s32.totalorder %s37, 0
      %p121 = por %p119, %p120
      %s122 = smul.u32 %s38, 8
      %s123 = sadd.s32 %s122, %s39
      %s124 = sld [smem:[#allocation5 + %s123]]
      %s125 = smul.u32 %s40, %s124
      %s126 = sld [smem:[#allocation6 + %s123]]
      %s127 = smul.u32 %s57, 8
      %s128 = sadd.s32 %s127, %s53
      %s129 = sld [smem:[#allocation5 + %s128]]
      %s130 = smul.u32 %s49, %s129
      %s131 = sld [smem:[#allocation6 + %s128]]
      %s132 = ssub.s32 %s126, %s131
      %s133 = ssub.s32 %s125, %s130
      %s134 = sor.u32 %s132, %s133
      %p135 = scmp.eq.s32.totalorder %s134, 0
      %s137 = sadd.s32 %s136, 1
      %s138 = scalar_select %p135, %s136, %s137
      %p141 = pneg %p135
      %p142 = scmp.eq.s32.totalorder %s31, 15
      %p143 = por %p141, %p142
      %p144 = scmp.ne.s32.totalorder %s136, %s139
      %p145 = scmp.eq.s32.totalorder %s31, 0
      %p146 = por %p144, %p145
      %p147 = scmp.ne.s32.totalorder %s136, %s139
      %p148 = scmp.eq.s32.totalorder %s36, 15
      %p149 = por %p147, %p148
      %p150 = scmp.ne.s32.totalorder %s139, %s140
      %p151 = scmp.eq.s32.totalorder %s36, 0
      %p152 = por %p150, %p151
      %p153 = scmp.ne.s32.totalorder %s139, %s140
      %p154 = scmp.eq.s32.totalorder %s37, 15
      %p155 = por %p153, %p154
      %p157 = scmp.ne.s32.totalorder %s140, %s156
      %p158 = scmp.eq.s32.totalorder %s37, 0
      %p159 = por %p157, %p158
      %s160 = ssub.s32 %s38, %s57
      %p161 = scmp.eq.s32.totalorder %s160, 0
      %s163 = sadd.s32 %s162, 1
      %s164 = scalar_select %p161, %s162, %s163
      %p167 = pneg %p161
      %p168 = scmp.eq.s32.totalorder %s31, 15
      %p169 = por %p167, %p168
      %p170 = scmp.ne.s32.totalorder %s162, %s165
      %p171 = scmp.eq.s32.totalorder %s31, 0
      %p172 = por %p170, %p171
      %p173 = scmp.ne.s32.totalorder %s162, %s165
      %p174 = scmp.eq.s32.totalorder %s36, 15
      %p175 = por %p173, %p174
      %p176 = scmp.ne.s32.totalorder %s165, %s166
      %p177 = scmp.eq.s32.totalorder %s36, 0
      %p178 = por %p176, %p177
      %p179 = scmp.ne.s32.totalorder %s165, %s166
      %p180 = scmp.eq.s32.totalorder %s37, 15
      %p181 = por %p179, %p180
      %p183 = scmp.ne.s32.totalorder %s166, %s182
      %p184 = scmp.eq.s32.totalorder %s37, 0
      %p185 = por %p183, %p184
      %s186 = ssub.s32 %s38, %s57
      %p187 = scmp.eq.s32.totalorder %s186, 0
      %s189 = sadd.s32 %s188, 1
      %s190 = scalar_select %p187, %s188, %s189
      %p193 = pneg %p187
      %p194 = scmp.eq.s32.totalorder %s31, 15
      %p195 = por %p193, %p194
      %p196 = scmp.ne.s32.totalorder %s188, %s191
      %p197 = scmp.eq.s32.totalorder %s31, 0
      %p198 = por %p196, %p197
      %p199 = scmp.ne.s32.totalorder %s188, %s191
      %p200 = scmp.eq.s32.totalorder %s36, 15
      %p201 = por %p199, %p200
      %p202 = scmp.ne.s32.totalorder %s191, %s192
      %p203 = scmp.eq.s32.totalorder %s36, 0
      %p204 = por %p202, %p203
      %p205 = scmp.ne.s32.totalorder %s191, %s192
      %p206 = scmp.eq.s32.totalorder %s37, 15
      %p207 = por %p205, %p206
      %p209 = scmp.ne.s32.totalorder %s192, %s208
      %p210 = scmp.eq.s32.totalorder %s37, 0
      %p211 = por %p209, %p210
      %p212 = scmp.le.s32.totalorder 1, %s31
      %p213 = scmp.lt.s32.totalorder %s31, 17
      %p214 = pnand %p212, %p213
      %p215 = pneg %p214
      // Predicated region
      $region9: #{moe_wrapper_forward.1} parent=5 // pred_check
        _
      $region10: #{moe_wrapper_forward.1} parent=5 // pred_check_branch
        %217 = sbr.rel (%p214) target = $region12
      $region11: #{moe_wrapper_forward.1} parent=5 // pred_region
        %s218 = ssub.s32 %s31, 1
      $region12: #{moe_wrapper_forward.1} parent=5 // pred_fallthru
        _
      %p219 = scmp.lt.s32.totalorder %s31, 16
      // Predicated region
      $region13: #{moe_wrapper_forward.1} parent=5 // pred_check
        %p220 = pneg %p219
      $region14: #{moe_wrapper_forward.1} parent=5 // pred_check_branch
        %222 = sbr.rel (%p220) target = $region16
      $region15: #{moe_wrapper_forward.1} parent=5 // pred_region
        // Predicated region
        $region17: #{moe_wrapper_forward.1} parent=15 // pred_check
          %p223 = pneg %p70
        $region18: #{moe_wrapper_forward.1} parent=15 // pred_check_branch
          %225 = sbr.rel (%p223) target = $region20
        $region19: #{moe_wrapper_forward.1} parent=15 // pred_region
          %s226 = smul.u32 16, %s38
          %p227 = scmp.lt.s32.totalorder %s226, 31
          %s228 = scalar_select %p227, %s226, 31
          %s229 = smul.addr %s228, 4
          %s230 = scalar_lea.vmem %s2, %s229
          %s231 = smul.u32 16, %s38
        $region20: #{moe_wrapper_forward.1} parent=15 // pred_fallthru
          _
        // Predicated region
        $region21: #{moe_wrapper_forward.1} parent=15 // pred_check
          %p232 = pneg %p108
        $region22: #{moe_wrapper_forward.1} parent=15 // pred_check_branch
          %234 = sbr.rel (%p232) target = $region24
        $region23: #{moe_wrapper_forward.1} parent=15 // pred_region
          %s235 = sand.u32 %s98, 1
          %s236 = scalar_lea.sflag [#allocation8], %s235
          %s237 = sand.u32 %s98, 1
          %s238 = smul.addr %s237, 256
          %s239 = scalar_lea.vmem [#allocation7], %s238
          %s240 = smul.u32 %s38, 8
          %s241 = sadd.s32 %s240, %s39
          %s242 = sld [smem:[#allocation5 + %s241]]
          %s243 = smul.u32 %s40, %s242
          %s244 = sld [smem:[#allocation6 + %s241]]
          %s246 = ssub.s32 4096, 4096
          %247 = vsyncadd %s236, %s246
          %s248 = smul.addr %s243, 64
          %s249 = smul.addr %s244, 64
          %s250 = sadd.s32 %s248, %s249
          %s251 = smul.addr %s250, 64
          %s252 = scalar_lea.hbm %s3, %s251
          %s253 = sshll.u32 %s239, 4
          %s254 = int_to_ptr.vmem [resolvable:$true] %s253
          %259 = dma.hbm_to_vmem [thread:$0]  %s252, 4096, %s254, %s236, 256, 256, 16
        $region24: #{moe_wrapper_forward.1} parent=15 // pred_fallthru
          _
        // Predicated region
        $region25: #{moe_wrapper_forward.1} parent=15 // pred_check
          %p260 = pneg %p146
        $region26: #{moe_wrapper_forward.1} parent=15 // pred_check_branch
          %262 = sbr.rel (%p260) target = $region28
        $region27: #{moe_wrapper_forward.1} parent=15 // pred_region
          %s263 = sand.u32 %s136, 1
          %s264 = scalar_lea.sflag [#allocation11], %s263
          %s265 = sand.u32 %s136, 1
          %s266 = smul.addr %s265, 128
          %s267 = scalar_lea.vmem [#allocation10], %s266
          %s268 = smul.u32 %s38, 8
          %s269 = sadd.s32 %s268, %s39
          %s270 = sld [smem:[#allocation5 + %s269]]
          %s271 = smul.u32 %s40, %s270
          %s272 = sld [smem:[#allocation6 + %s269]]
          %s274 = ssub.s32 2048, 2048
          %275 = vsyncadd %s264, %s274
          %s276 = smul.addr %s271, 32
          %s277 = smul.addr %s272, 32
          %s278 = sadd.s32 %s276, %s277
          %s279 = smul.addr %s278, 64
          %s280 = scalar_lea.hbm %s4, %s279
          %s281 = sshll.u32 %s267, 4
          %s282 = int_to_ptr.vmem [resolvable:$true] %s281
          %287 = dma.hbm_to_vmem [thread:$0]  %s280, 2048, %s282, %s264, 64, 64, 4
        $region28: #{moe_wrapper_forward.1} parent=15 // pred_fallthru
          _
        // Predicated region
        $region29: #{moe_wrapper_forward.1} parent=15 // pred_check
          %p288 = pneg %p172
        $region30: #{moe_wrapper_forward.1} parent=15 // pred_check_branch
          %290 = sbr.rel (%p288) target = $region32
        $region31: #{moe_wrapper_forward.1} parent=15 // pred_region
          %s291 = smul.u32 16, %s38
          %p292 = scmp.lt.s32.totalorder %s291, 31
          %s293 = scalar_select %p292, %s291, 31
          %s294 = smul.addr %s293, 8
          %s295 = scalar_lea.vmem %s5, %s294
          %s296 = smul.u32 16, %s38
        $region32: #{moe_wrapper_forward.1} parent=15 // pred_fallthru
          _
      $region16: #{moe_wrapper_forward.1} parent=5 // pred_fallthru
        _
      %p297 = scmp.le.s32.totalorder 1, %s31
      %p298 = scmp.lt.s32.totalorder %s31, 17
      %p299 = pnand %p297, %p298
      %p300 = pneg %p299
      // Predicated region
      $region33: #{moe_wrapper_forward.1} parent=5 // pred_check
        _
      $region34: #{moe_wrapper_forward.1} parent=5 // pred_check_branch
        %302 = sbr.rel (%p299) target = $region36
      $region35: #{moe_wrapper_forward.1} parent=5 // pred_region
        %s303 = ssub.s32 %s31, 1
        %s304 = sand.u32 %s101, 1
        %s305 = scalar_lea.sflag [#allocation8], %s304
        %s306 = sand.u32 %s101, 1
        %s307 = smul.addr %s306, 256
        %s308 = scalar_lea.vmem [#allocation7], %s307
        // Predicated region
        $region37: #{moe_wrapper_forward.1} parent=35 // pred_check
          %p309 = pneg %p114
        $region38: #{moe_wrapper_forward.1} parent=35 // pred_check_branch
          %311 = sbr.rel (%p309) target = $region40
        $region39: #{moe_wrapper_forward.1} parent=35 // pred_region
          %312 = dma.done %s305, 4096
        $region40: #{moe_wrapper_forward.1} parent=35 // pred_fallthru
          _
        %s313 = sand.u32 %s139, 1
        %s314 = scalar_lea.sflag [#allocation11], %s313
        %s315 = sand.u32 %s139, 1
        %s316 = smul.addr %s315, 128
        %s317 = scalar_lea.vmem [#allocation10], %s316
        // Predicated region
        $region41: #{moe_wrapper_forward.1} parent=35 // pred_check
          %p318 = pneg %p152
        $region42: #{moe_wrapper_forward.1} parent=35 // pred_check_branch
          %320 = sbr.rel (%p318) target = $region44
        $region43: #{moe_wrapper_forward.1} parent=35 // pred_region
          %321 = dma.done %s314, 2048
        $region44: #{moe_wrapper_forward.1} parent=35 // pred_fallthru
          _
        %s322 = smul.u32 16, %s41
        %p323 = scmp.lt.s32.totalorder %s322, 31
        %s324 = scalar_select %p323, %s322, 31
        %s325 = smul.addr %s324, 4
        %s326 = scalar_lea.vmem %s2, %s325
        %p327 = pneg %p76
        %p328 = pneg %p73
        %s329 = sand.u32 %s101, 1
        %s330 = scalar_lea.sflag [#allocation8], %s329
        %s331 = sand.u32 %s101, 1
        %s332 = smul.addr %s331, 256
        %s333 = scalar_lea.vmem [#allocation7], %s332
        %p334 = pneg %p114
        %p335 = pneg %p111
        %s336 = sand.u32 %s139, 1
        %s337 = scalar_lea.sflag [#allocation11], %s336
        %s338 = sand.u32 %s139, 1
        %s339 = smul.addr %s338, 128
        %s340 = scalar_lea.vmem [#allocation10], %s339
        %p341 = pneg %p152
        %p342 = pneg %p149
        %s343 = smul.u32 16, %s41
        %p344 = scmp.lt.s32.totalorder %s343, 31
        %s345 = scalar_select %p344, %s343, 31
        %s346 = smul.addr %s345, 8
        %s347 = scalar_lea.vmem %s5, %s346
        %p348 = pneg %p178
        %p349 = pneg %p175
        %p350 = pneg %p204
        %p351 = pneg %p201
        %s352 = sand.u32 %s191, 1
        %s353 = scalar_lea.sflag [#allocation9], %s352
        %s354 = sand.u32 %s191, 1
        %s355 = smul.addr %s354, 64
        %s356 = scalar_lea.vmem [#allocation12], %s355
        %s357 = smul.u32 16, %s41
        %p358 = scmp.lt.s32.totalorder %s357, 31
        %s359 = scalar_select %p358, %s357, 31
        %s360 = smul.addr %s359, 4
        %s361 = scalar_lea.vmem %s2, %s360
        %s362 = smul.u32 16, %s41
        %s363 = smul.u32 %s41, 8
        %s364 = sadd.s32 %s363, %s42
        %s365 = sld [smem:[#allocation5 + %s364]]
        %s366 = smul.u32 %s43, %s365
        %s367 = sld [smem:[#allocation6 + %s364]]
        %s368 = smul.u32 %s41, 8
        %s369 = sadd.s32 %s368, %s42
        %s370 = sld [smem:[#allocation5 + %s369]]
        %s371 = smul.u32 %s43, %s370
        %s372 = sld [smem:[#allocation6 + %s369]]
        %s373 = smul.u32 16, %s41
        %p374 = scmp.lt.s32.totalorder %s373, 31
        %s375 = scalar_select %p374, %s373, 31
        %s376 = smul.addr %s375, 8
        %s377 = scalar_lea.vmem %s5, %s376
        %s378 = smul.u32 16, %s41
        %s379 = smul.u32 16, %s41
        %s381 = smul.u32 %s41, 8
        %s382 = sadd.s32 %s381, %s42
        %s383 = sld [smem:[#allocation5 + %s382]]
        %p384 = scmp.ne.s32.totalorder %s383, 0
        %p385 = scmp.eq.s32.totalorder %s42, 0
        %p386 = scmp.eq.s32.totalorder %s43, 0
        %p387 = pnand %p385, %p386
        %p388 = pneg %p387
        %p389 = scmp.eq.s32.totalorder %s383, 0
        %p390 = pnand %p388, %p389
        %p391 = pneg %p390
        // Predicated region
        $region45: #{moe_wrapper_forward.1} parent=35 // pred_check
          _
        $region46: #{moe_wrapper_forward.1} parent=35 // pred_check_branch
          %393 = sbr.rel (%p390) target = $region48
        $region47: #{moe_wrapper_forward.1} parent=35 // pred_region
          %394 = vst [vmem:[#allocation2] sm:$0xff] 0.0
          %395 = vst [vmem:[#allocation2 + $0x8] sm:$0xff] 0.0
          %396 = vst [vmem:[#allocation2 + $0x10] sm:$0xff] 0.0
          %397 = vst [vmem:[#allocation2 + $0x18] sm:$0xff] 0.0
          %398 = vst [vmem:[#allocation2 + $0x20] sm:$0xff] 0.0
          %399 = vst [vmem:[#allocation2 + $0x28] sm:$0xff] 0.0
          %400 = vst [vmem:[#allocation2 + $0x30] sm:$0xff] 0.0
          %401 = vst [vmem:[#allocation2 + $0x38] sm:$0xff] 0.0
          %402 = vst [vmem:[#allocation2 + $0x40] sm:$0xff] 0.0
          %403 = vst [vmem:[#allocation2 + $0x48] sm:$0xff] 0.0
          %404 = vst [vmem:[#allocation2 + $0x50] sm:$0xff] 0.0
          %405 = vst [vmem:[#allocation2 + $0x58] sm:$0xff] 0.0
          %406 = vst [vmem:[#allocation2 + $0x60] sm:$0xff] 0.0
          %407 = vst [vmem:[#allocation2 + $0x68] sm:$0xff] 0.0
          %408 = vst [vmem:[#allocation2 + $0x70] sm:$0xff] 0.0
          %409 = vst [vmem:[#allocation2 + $0x78] sm:$0xff] 0.0
        $region48: #{moe_wrapper_forward.1} parent=35 // pred_fallthru
          _
        // Predicated region
        $region49: #{moe_wrapper_forward.1} parent=35 // pred_check
          %p410 = pneg %p384
        $region50: #{moe_wrapper_forward.1} parent=35 // pred_check_branch
          %412 = sbr.rel (%p410) target = $region52
        $region51: #{moe_wrapper_forward.1} parent=35 // pred_region
          // Predicated region
          $region53: #{moe_wrapper_forward.1} parent=51 // pred_check
            %p413 = pneg %p386
          $region54: #{moe_wrapper_forward.1} parent=51 // pred_check_branch
            %415 = sbr.rel (%p413) target = $region56
          $region55: #{moe_wrapper_forward.1} parent=51 // pred_region
            %v416 = vld [vmem:[%s377] sm:$0xff]
            %v417 = vld [vmem:[%s377 + $0x8] sm:$0xff]
            %v418 = vld [vmem:[%s377 + $0x10] sm:$0xff]
            %v419 = vld [vmem:[%s377 + $0x18] sm:$0xff]
            %v420 = vld [vmem:[%s377 + $0x20] sm:$0xff]
            %v421 = vld [vmem:[%s377 + $0x28] sm:$0xff]
            %v422 = vld [vmem:[%s377 + $0x30] sm:$0xff]
            %v423 = vld [vmem:[%s377 + $0x38] sm:$0xff]
            %v424 = vld [vmem:[%s377 + $0x40] sm:$0xff]
            %v425 = vld [vmem:[%s377 + $0x48] sm:$0xff]
            %v426 = vld [vmem:[%s377 + $0x50] sm:$0xff]
            %v427 = vld [vmem:[%s377 + $0x58] sm:$0xff]
            %v428 = vld [vmem:[%s377 + $0x60] sm:$0xff]
            %v429 = vld [vmem:[%s377 + $0x68] sm:$0xff]
            %v430 = vld [vmem:[%s377 + $0x70] sm:$0xff]
            %v431 = vld [vmem:[%s377 + $0x78] sm:$0xff]
            %v432 = vlaneseq
            %v433 = vand.u32 %v432, 127
            %v434 = vstv %s42
            %vm435 = vcmp.eq.s32.totalorder %v433, %v434
            %v436 = vsel %vm435, %v416, 0.0
            %v437 = vsel %vm435, %v417, 0.0
            %v438 = vsel %vm435, %v418, 0.0
            %v439 = vsel %vm435, %v419, 0.0
            %v440 = vsel %vm435, %v420, 0.0
            %v441 = vsel %vm435, %v421, 0.0
            %v442 = vsel %vm435, %v422, 0.0
            %v443 = vsel %vm435, %v423, 0.0
            %v444 = vsel %vm435, %v424, 0.0
            %v445 = vsel %vm435, %v425, 0.0
            %v446 = vsel %vm435, %v426, 0.0
            %v447 = vsel %vm435, %v427, 0.0
            %v448 = vsel %vm435, %v428, 0.0
            %v449 = vsel %vm435, %v429, 0.0
            %v450 = vsel %vm435, %v430, 0.0
            %v451 = vsel %vm435, %v431, 0.0
            %vm452 = vcmask 64512
            %v453 = vsel %vm452, %v436, 0.0
            %454 = vadd.xlane.f32.xlu0 %v453
            %v455 = vpop.xlane.xlu0 %454
            %v456 = vsel %vm452, %v437, 0.0
            %457 = vadd.xlane.f32.xlu0 %v456
            %v458 = vpop.xlane.xlu0 %457
            %v459 = vsel %vm452, %v438, 0.0
            %460 = vadd.xlane.f32.xlu0 %v459
            %v461 = vpop.xlane.xlu0 %460
            %v462 = vsel %vm452, %v439, 0.0
            %463 = vadd.xlane.f32.xlu0 %v462
            %v464 = vpop.xlane.xlu0 %463
            %v465 = vsel %vm452, %v440, 0.0
            %466 = vadd.xlane.f32.xlu0 %v465
            %v467 = vpop.xlane.xlu0 %466
            %v468 = vsel %vm452, %v441, 0.0
            %469 = vadd.xlane.f32.xlu0 %v468
            %v470 = vpop.xlane.xlu0 %469
            %v471 = vsel %vm452, %v442, 0.0
            %472 = vadd.xlane.f32.xlu0 %v471
            %v473 = vpop.xlane.xlu0 %472
            %v474 = vsel %vm452, %v443, 0.0
            %475 = vadd.xlane.f32.xlu0 %v474
            %v476 = vpop.xlane.xlu0 %475
            %v477 = vsel %vm452, %v444, 0.0
            %478 = vadd.xlane.f32.xlu0 %v477
            %v479 = vpop.xlane.xlu0 %478
            %v480 = vsel %vm452, %v445, 0.0
            %481 = vadd.xlane.f32.xlu0 %v480
            %v482 = vpop.xlane.xlu0 %481
            %v483 = vsel %vm452, %v446, 0.0
            %484 = vadd.xlane.f32.xlu0 %v483
            %v485 = vpop.xlane.xlu0 %484
            %v486 = vsel %vm452, %v447, 0.0
            %487 = vadd.xlane.f32.xlu0 %v486
            %v488 = vpop.xlane.xlu0 %487
            %v489 = vsel %vm452, %v448, 0.0
            %490 = vadd.xlane.f32.xlu0 %v489
            %v491 = vpop.xlane.xlu0 %490
            %v492 = vsel %vm452, %v449, 0.0
            %493 = vadd.xlane.f32.xlu0 %v492
            %v494 = vpop.xlane.xlu0 %493
            %v495 = vsel %vm452, %v450, 0.0
            %496 = vadd.xlane.f32.xlu0 %v495
            %v497 = vpop.xlane.xlu0 %496
            %v498 = vsel %vm452, %v451, 0.0
            %499 = vadd.xlane.f32.xlu0 %v498
            %v500 = vpop.xlane.xlu0 %499
            %vm501 = vcmask 7168
            %502 = vst.msk [vmem:[#allocation3] sm:$0xff] %vm501, %v455
            %503 = vst.msk [vmem:[#allocation3 + $0x8] sm:$0xff] %vm501, %v458
            %504 = vst.msk [vmem:[#allocation3 + $0x10] sm:$0xff] %vm501, %v461
            %505 = vst.msk [vmem:[#allocation3 + $0x18] sm:$0xff] %vm501, %v464
            %506 = vst.msk [vmem:[#allocation3 + $0x20] sm:$0xff] %vm501, %v467
            %507 = vst.msk [vmem:[#allocation3 + $0x28] sm:$0xff] %vm501, %v470
            %508 = vst.msk [vmem:[#allocation3 + $0x30] sm:$0xff] %vm501, %v473
            %509 = vst.msk [vmem:[#allocation3 + $0x38] sm:$0xff] %vm501, %v476
            %510 = vst.msk [vmem:[#allocation3 + $0x40] sm:$0xff] %vm501, %v479
            %511 = vst.msk [vmem:[#allocation3 + $0x48] sm:$0xff] %vm501, %v482
            %512 = vst.msk [vmem:[#allocation3 + $0x50] sm:$0xff] %vm501, %v485
            %513 = vst.msk [vmem:[#allocation3 + $0x58] sm:$0xff] %vm501, %v488
            %514 = vst.msk [vmem:[#allocation3 + $0x60] sm:$0xff] %vm501, %v491
            %515 = vst.msk [vmem:[#allocation3 + $0x68] sm:$0xff] %vm501, %v494
            %516 = vst.msk [vmem:[#allocation3 + $0x70] sm:$0xff] %vm501, %v497
            %517 = vst.msk [vmem:[#allocation3 + $0x78] sm:$0xff] %vm501, %v500
          $region56: #{moe_wrapper_forward.1} parent=51 // pred_fallthru
            _
          %v518 = vld [vmem:[%s361] sm:$0xf]
          %v519 = vld [vmem:[%s361 + $0x4] sm:$0xf]
          %v520 = vld [vmem:[%s361 + $0x8] sm:$0xf]
          %v521 = vld [vmem:[%s361 + $0xc] sm:$0xf]
          %v522 = vld [vmem:[%s361 + $0x10] sm:$0xf]
          %v523 = vld [vmem:[%s361 + $0x14] sm:$0xf]
          %v524 = vld [vmem:[%s361 + $0x18] sm:$0xf]
          %v525 = vld [vmem:[%s361 + $0x1c] sm:$0xf]
          %v526 = vld [vmem:[%s361 + $0x20] sm:$0xf]
          %v527 = vld [vmem:[%s361 + $0x24] sm:$0xf]
          %v528 = vld [vmem:[%s361 + $0x28] sm:$0xf]
          %v529 = vld [vmem:[%s361 + $0x2c] sm:$0xf]
          %v530 = vld [vmem:[%s361 + $0x30] sm:$0xf]
          %v531 = vld [vmem:[%s361 + $0x34] sm:$0xf]
          %v532 = vld [vmem:[%s361 + $0x38] sm:$0xf]
          %v533 = vld [vmem:[%s361 + $0x3c] sm:$0xf]
          %v534 = vld [vmem:[%s308] sm:$0xff]
          %v535 = vld [vmem:[%s308 + $0x8] sm:$0xff]
          %v536 = vld [vmem:[%s308 + $0x10] sm:$0xff]
          %v537 = vld [vmem:[%s308 + $0x18] sm:$0xff]
          %v538 = vld [vmem:[%s308 + $0x20] sm:$0xff]
          %v539 = vld [vmem:[%s308 + $0x28] sm:$0xff]
          %v540 = vld [vmem:[%s308 + $0x30] sm:$0xff]
          %v541 = vld [vmem:[%s308 + $0x38] sm:$0xff]
          %v542 = vld [vmem:[%s308 + $0x40] sm:$0xff]
          %v543 = vld [vmem:[%s308 + $0x48] sm:$0xff]
          %v544 = vld [vmem:[%s308 + $0x50] sm:$0xff]
          %v545 = vld [vmem:[%s308 + $0x58] sm:$0xff]
          %v546 = vld [vmem:[%s308 + $0x60] sm:$0xff]
          %v547 = vld [vmem:[%s308 + $0x68] sm:$0xff]
          %v548 = vld [vmem:[%s308 + $0x70] sm:$0xff]
          %v549 = vld [vmem:[%s308 + $0x78] sm:$0xff]
          %v550 = vld [vmem:[%s308 + $0x80] sm:$0xff]
          %v551 = vld [vmem:[%s308 + $0x88] sm:$0xff]
          %v552 = vld [vmem:[%s308 + $0x90] sm:$0xff]
          %v553 = vld [vmem:[%s308 + $0x98] sm:$0xff]
          %v554 = vld [vmem:[%s308 + $0xa0] sm:$0xff]
          %v555 = vld [vmem:[%s308 + $0xa8] sm:$0xff]
          %v556 = vld [vmem:[%s308 + $0xb0] sm:$0xff]
          %v557 = vld [vmem:[%s308 + $0xb8] sm:$0xff]
          %v558 = vld [vmem:[%s308 + $0xc0] sm:$0xff]
          %v559 = vld [vmem:[%s308 + $0xc8] sm:$0xff]
          %v560 = vld [vmem:[%s308 + $0xd0] sm:$0xff]
          %v561 = vld [vmem:[%s308 + $0xd8] sm:$0xff]
          %v562 = vld [vmem:[%s308 + $0xe0] sm:$0xff]
          %v563 = vld [vmem:[%s308 + $0xe8] sm:$0xff]
          %v564 = vld [vmem:[%s308 + $0xf0] sm:$0xff]
          %v565 = vld [vmem:[%s308 + $0xf8] sm:$0xff]
          %v566 = vld [vmem:[%s317] sm:$0xf]
          %v567 = vld [vmem:[%s317 + $0x4] sm:$0xf]
          %v568 = vld [vmem:[%s317 + $0x8] sm:$0xf]
          %v569 = vld [vmem:[%s317 + $0xc] sm:$0xf]
          %v570 = vld [vmem:[%s317 + $0x10] sm:$0xf]
          %v571 = vld [vmem:[%s317 + $0x14] sm:$0xf]
          %v572 = vld [vmem:[%s317 + $0x18] sm:$0xf]
          %v573 = vld [vmem:[%s317 + $0x1c] sm:$0xf]
          %v574 = vld [vmem:[%s317 + $0x20] sm:$0xf]
          %v575 = vld [vmem:[%s317 + $0x24] sm:$0xf]
          %v576 = vld [vmem:[%s317 + $0x28] sm:$0xf]
          %v577 = vld [vmem:[%s317 + $0x2c] sm:$0xf]
          %v578 = vld [vmem:[%s317 + $0x30] sm:$0xf]
          %v579 = vld [vmem:[%s317 + $0x34] sm:$0xf]
          %v580 = vld [vmem:[%s317 + $0x38] sm:$0xf]
          %v581 = vld [vmem:[%s317 + $0x3c] sm:$0xf]
          %v582 = vld [vmem:[%s317 + $0x40] sm:$0xf]
          %v583 = vld [vmem:[%s317 + $0x44] sm:$0xf]
          %v584 = vld [vmem:[%s317 + $0x48] sm:$0xf]
          %v585 = vld [vmem:[%s317 + $0x4c] sm:$0xf]
          %v586 = vld [vmem:[%s317 + $0x50] sm:$0xf]
          %v587 = vld [vmem:[%s317 + $0x54] sm:$0xf]
          %v588 = vld [vmem:[%s317 + $0x58] sm:$0xf]
          %v589 = vld [vmem:[%s317 + $0x5c] sm:$0xf]
          %v590 = vld [vmem:[%s317 + $0x60] sm:$0xf]
          %v591 = vld [vmem:[%s317 + $0x64] sm:$0xf]
          %v592 = vld [vmem:[%s317 + $0x68] sm:$0xf]
          %v593 = vld [vmem:[%s317 + $0x6c] sm:$0xf]
          %v594 = vld [vmem:[%s317 + $0x70] sm:$0xf]
          %v595 = vld [vmem:[%s317 + $0x74] sm:$0xf]
          %v596 = vld [vmem:[%s317 + $0x78] sm:$0xf]
          %v597 = vld [vmem:[%s317 + $0x7c] sm:$0xf]
          %v614 = vunpack.c.l.b16 %v518
          %v615 = vunpack.c.l.b16 %v519
          %v616 = vunpack.c.l.b16 %v520
          %v617 = vunpack.c.l.b16 %v521
          %v618 = vunpack.c.l.b16 %v522
          %v619 = vunpack.c.l.b16 %v523
          %v620 = vunpack.c.l.b16 %v524
          %v621 = vunpack.c.l.b16 %v525
          %v622 = vunpack.c.l.b16 %v526
          %v623 = vunpack.c.l.b16 %v527
          %v624 = vunpack.c.l.b16 %v528
          %v625 = vunpack.c.l.b16 %v529
          %v626 = vunpack.c.l.b16 %v530
          %v627 = vunpack.c.l.b16 %v531
          %v628 = vunpack.c.l.b16 %v532
          %v629 = vunpack.c.l.b16 %v533
          %v630 = vpack.c.b16 %v615, %v614
          %v631 = vpack.c.b16 %v617, %v616
          %v632 = vpack.c.b16 %v619, %v618
          %v633 = vpack.c.b16 %v621, %v620
          %v634 = vpack.c.b16 %v623, %v622
          %v635 = vpack.c.b16 %v625, %v624
          %v636 = vpack.c.b16 %v627, %v626
          %v637 = vpack.c.b16 %v629, %v628
          %v678 = vunpack.c.l.b16 %v534
          %v679 = vunpack.c.h.b16 %v534
          %v680 = vunpack.c.l.b16 %v535
          %v681 = vunpack.c.h.b16 %v535
          %v682 = vunpack.c.l.b16 %v536
          %v683 = vunpack.c.h.b16 %v536
          %v684 = vunpack.c.l.b16 %v537
          %v685 = vunpack.c.h.b16 %v537
          %v686 = vunpack.c.l.b16 %v538
          %v687 = vunpack.c.h.b16 %v538
          %v688 = vunpack.c.l.b16 %v539
          %v689 = vunpack.c.h.b16 %v539
          %v690 = vunpack.c.l.b16 %v540
          %v691 = vunpack.c.h.b16 %v540
          %v692 = vunpack.c.l.b16 %v541
          %v693 = vunpack.c.h.b16 %v541
          %v694 = vunpack.c.l.b16 %v542
          %v695 = vunpack.c.h.b16 %v542
          %v696 = vunpack.c.l.b16 %v543
          %v697 = vunpack.c.h.b16 %v543
          %v698 = vunpack.c.l.b16 %v544
          %v699 = vunpack.c.h.b16 %v544
          %v700 = vunpack.c.l.b16 %v545
          %v701 = vunpack.c.h.b16 %v545
          %v702 = vunpack.c.l.b16 %v546
          %v703 = vunpack.c.h.b16 %v546
          %v704 = vunpack.c.l.b16 %v547
          %v705 = vunpack.c.h.b16 %v547
          %v706 = vunpack.c.l.b16 %v548
          %v707 = vunpack.c.h.b16 %v548
          %v708 = vunpack.c.l.b16 %v549
          %v709 = vunpack.c.h.b16 %v549
          %v710 = vunpack.c.l.b16 %v550
          %v711 = vunpack.c.h.b16 %v550
          %v712 = vunpack.c.l.b16 %v551
          %v713 = vunpack.c.h.b16 %v551
          %v714 = vunpack.c.l.b16 %v552
          %v715 = vunpack.c.h.b16 %v552
          %v716 = vunpack.c.l.b16 %v553
          %v717 = vunpack.c.h.b16 %v553
          %v718 = vunpack.c.l.b16 %v554
          %v719 = vunpack.c.h.b16 %v554
          %v720 = vunpack.c.l.b16 %v555
          %v721 = vunpack.c.h.b16 %v555
          %v722 = vunpack.c.l.b16 %v556
          %v723 = vunpack.c.h.b16 %v556
          %v724 = vunpack.c.l.b16 %v557
          %v725 = vunpack.c.h.b16 %v557
          %v726 = vunpack.c.l.b16 %v558
          %v727 = vunpack.c.h.b16 %v558
          %v728 = vunpack.c.l.b16 %v559
          %v729 = vunpack.c.h.b16 %v559
          %v730 = vunpack.c.l.b16 %v560
          %v731 = vunpack.c.h.b16 %v560
          %v732 = vunpack.c.l.b16 %v561
          %v733 = vunpack.c.h.b16 %v561
          %v734 = vunpack.c.l.b16 %v562
          %v735 = vunpack.c.h.b16 %v562
          %v736 = vunpack.c.l.b16 %v563
          %v737 = vunpack.c.h.b16 %v563
          %v738 = vunpack.c.l.b16 %v564
          %v739 = vunpack.c.h.b16 %v564
          %v740 = vunpack.c.l.b16 %v565
          %v741 = vunpack.c.h.b16 %v565
          %v742 = vpack.c.b16 %v682, %v678
          %v743 = vpack.c.b16 %v683, %v679
          %v744 = vpack.c.b16 %v684, %v680
          %v745 = vpack.c.b16 %v685, %v681
          %v746 = vpack.c.b16 %v690, %v686
          %v747 = vpack.c.b16 %v691, %v687
          %v748 = vpack.c.b16 %v692, %v688
          %v749 = vpack.c.b16 %v693, %v689
          %v750 = vpack.c.b16 %v698, %v694
          %v751 = vpack.c.b16 %v699, %v695
          %v752 = vpack.c.b16 %v700, %v696
          %v753 = vpack.c.b16 %v701, %v697
          %v754 = vpack.c.b16 %v706, %v702
          %v755 = vpack.c.b16 %v707, %v703
          %v756 = vpack.c.b16 %v708, %v704
          %v757 = vpack.c.b16 %v709, %v705
          %v758 = vpack.c.b16 %v714, %v710
          %v759 = vpack.c.b16 %v715, %v711
          %v760 = vpack.c.b16 %v716, %v712
          %v761 = vpack.c.b16 %v717, %v713
          %v762 = vpack.c.b16 %v722, %v718
          %v763 = vpack.c.b16 %v723, %v719
          %v764 = vpack.c.b16 %v724, %v720
          %v765 = vpack.c.b16 %v725, %v721
          %v766 = vpack.c.b16 %v730, %v726
          %v767 = vpack.c.b16 %v731, %v727
          %v768 = vpack.c.b16 %v732, %v728
          %v769 = vpack.c.b16 %v733, %v729
          %v770 = vpack.c.b16 %v738, %v734
          %v771 = vpack.c.b16 %v739, %v735
          %v772 = vpack.c.b16 %v740, %v736
          %v773 = vpack.c.b16 %v741, %v737
          %806 = vmatprep.subr.bf16.mxu0 %v743
          %807 = vmatpush1.bf16.msra.mxu0 %v742
          %808 = vmatprep.subr.bf16.mxu0 %v747
          %809 = vmatpush1.bf16.msra.mxu0 %v746
          %810 = vmatprep.subr.bf16.mxu0 %v751
          %811 = vmatpush1.bf16.msra.mxu0 %v750
          %812 = vmatprep.subr.bf16.mxu0 %v755
          %813 = vmatpush1.bf16.msra.mxu0 %v754
          %814 = vmatprep.subr.bf16.mxu0 %v759
          %815 = vmatpush1.bf16.msra.mxu0 %v758
          %816 = vmatprep.subr.bf16.mxu0 %v763
          %817 = vmatpush1.bf16.msra.mxu0 %v762
          %818 = vmatprep.subr.bf16.mxu0 %v767
          %819 = vmatpush1.bf16.msra.mxu0 %v766
          %820 = vmatprep.subr.bf16.mxu0 %v771
          %821 = vmatpush1.bf16.msra.mxu0 %v770
          %822 = vmatprep.subr.bf16.mxu0 0
          %823 = vmatpush1.bf16.msra.mxu0 0
          %824 = vmatprep.subr.bf16.mxu0 0
          %825 = vmatpush1.bf16.msra.mxu0 0
          %826 = vmatprep.subr.bf16.mxu0 0
          %827 = vmatpush1.bf16.msra.mxu0 0
          %828 = vmatprep.subr.bf16.mxu0 0
          %829 = vmatpush1.bf16.msra.mxu0 0
          %830 = vmatprep.subr.bf16.mxu0 0
          %831 = vmatpush1.bf16.msra.mxu0 0
          %832 = vmatprep.subr.bf16.mxu0 0
          %833 = vmatpush1.bf16.msra.mxu0 0
          %834 = vmatprep.subr.bf16.mxu0 0
          %835 = vmatpush1.bf16.msra.mxu0 0
          %836 = vmatprep.subr.bf16.mxu0 0
          %837 = vmatpush1.bf16.msra.mxu0 0
          %838 = vmatprep.mubr.bf16.mxu0 0
          %839 = vmatmul.mubr.bf16.gmra.mrb[0].mxu0 %v630
          %v840 = vpop.f32.mrb[0].mxu0
          %v841 = vadd.f32 0.0, %v840
          %v842 = vpop.f32.mrb[0].mxu0
          %v843 = vadd.f32 0.0, %v842
          %v844 = vpop.f32.mrb[0].mxu0
          %v845 = vadd.f32 0.0, %v844
          %v846 = vpop.f32.mrb[0].mxu0
          %v847 = vadd.f32 0.0, %v846
          %848 = vmatprep.mubr.bf16.mxu0 0
          %849 = vmatmul.mubr.bf16.gmra.mrb[0].mxu0 %v631
          %v850 = vpop.f32.mrb[0].mxu0
          %v851 = vadd.f32 0.0, %v850
          %v852 = vpop.f32.mrb[0].mxu0
          %v853 = vadd.f32 0.0, %v852
          %v854 = vpop.f32.mrb[0].mxu0
          %v855 = vadd.f32 0.0, %v854
          %v856 = vpop.f32.mrb[0].mxu0
          %v857 = vadd.f32 0.0, %v856
          %858 = vmatprep.mubr.bf16.mxu0 0
          %859 = vmatmul.mubr.bf16.gmra.mrb[0].mxu0 %v632
          %v860 = vpop.f32.mrb[0].mxu0
          %v861 = vadd.f32 0.0, %v860
          %v862 = vpop.f32.mrb[0].mxu0
          %v863 = vadd.f32 0.0, %v862
          %v864 = vpop.f32.mrb[0].mxu0
          %v865 = vadd.f32 0.0, %v864
          %v866 = vpop.f32.mrb[0].mxu0
          %v867 = vadd.f32 0.0, %v866
          %868 = vmatprep.mubr.bf16.mxu0 0
          %869 = vmatmul.mubr.bf16.gmra.mrb[0].mxu0 %v633
          %v870 = vpop.f32.mrb[0].mxu0
          %v871 = vadd.f32 0.0, %v870
          %v872 = vpop.f32.mrb[0].mxu0
          %v873 = vadd.f32 0.0, %v872
          %v874 = vpop.f32.mrb[0].mxu0
          %v875 = vadd.f32 0.0, %v874
          %v876 = vpop.f32.mrb[0].mxu0
          %v877 = vadd.f32 0.0, %v876
          %878 = vmatprep.mubr.bf16.mxu0 0
          %879 = vmatmul.mubr.bf16.gmra.mrb[0].mxu0 %v634
          %v880 = vpop.f32.mrb[0].mxu0
          %v881 = vadd.f32 0.0, %v880
          %v882 = vpop.f32.mrb[0].mxu0
          %v883 = vadd.f32 0.0, %v882
          %v884 = vpop.f32.mrb[0].mxu0
          %v885 = vadd.f32 0.0, %v884
          %v886 = vpop.f32.mrb[0].mxu0
          %v887 = vadd.f32 0.0, %v886
          %888 = vmatprep.mubr.bf16.mxu0 0
          %889 = vmatmul.mubr.bf16.gmra.mrb[0].mxu0 %v635
          %v890 = vpop.f32.mrb[0].mxu0
          %v891 = vadd.f32 0.0, %v890
          %v892 = vpop.f32.mrb[0].mxu0
          %v893 = vadd.f32 0.0, %v892
          %v894 = vpop.f32.mrb[0].mxu0
          %v895 = vadd.f32 0.0, %v894
          %v896 = vpop.f32.mrb[0].mxu0
          %v897 = vadd.f32 0.0, %v896
          %898 = vmatprep.mubr.bf16.mxu0 0
          %899 = vmatmul.mubr.bf16.gmra.mrb[0].mxu0 %v636
          %v900 = vpop.f32.mrb[0].mxu0
          %v901 = vadd.f32 0.0, %v900
          %v902 = vpop.f32.mrb[0].mxu0
          %v903 = vadd.f32 0.0, %v902
          %v904 = vpop.f32.mrb[0].mxu0
          %v905 = vadd.f32 0.0, %v904
          %v906 = vpop.f32.mrb[0].mxu0
          %v907 = vadd.f32 0.0, %v906
          %908 = vmatprep.mubr.bf16.mxu0 0
          %909 = vmatmul.mubr.bf16.gmra.mrb[0].mxu0 %v637
          %v910 = vpop.f32.mrb[0].mxu0
          %v911 = vadd.f32 0.0, %v910
          %v912 = vpop.f32.mrb[0].mxu0
          %v913 = vadd.f32 0.0, %v912
          %v914 = vpop.f32.mrb[0].mxu0
          %v915 = vadd.f32 0.0, %v914
          %v916 = vpop.f32.mrb[0].mxu0
          %v917 = vadd.f32 0.0, %v916
          %918 = vdwg.mxu0
          %919 = vmatprep.subr.bf16.mxu0 %v745
          %920 = vmatpush1.bf16.msra.mxu0 %v744
          %921 = vmatprep.subr.bf16.mxu0 %v749
          %922 = vmatpush1.bf16.msra.mxu0 %v748
          %923 = vmatprep.subr.bf16.mxu0 %v753
          %924 = vmatpush1.bf16.msra.mxu0 %v752
          %925 = vmatprep.subr.bf16.mxu0 %v757
          %926 = vmatpush1.bf16.msra.mxu0 %v756
          %927 = vmatprep.subr.bf16.mxu0 %v761
          %928 = vmatpush1.bf16.msra.mxu0 %v760
          %929 = vmatprep.subr.bf16.mxu0 %v765
          %930 = vmatpush1.bf16.msra.mxu0 %v764
          %931 = vmatprep.subr.bf16.mxu0 %v769
          %932 = vmatpush1.bf16.msra.mxu0 %v768
          %933 = vmatprep.subr.bf16.mxu0 %v773
          %934 = vmatpush1.bf16.msra.mxu0 %v772
          %935 = vmatprep.subr.bf16.mxu0 0
          %936 = vmatpush1.bf16.msra.mxu0 0
          %937 = vmatprep.subr.bf16.mxu0 0
          %938 = vmatpush1.bf16.msra.mxu0 0
          %939 = vmatprep.subr.bf16.mxu0 0
          %940 = vmatpush1.bf16.msra.mxu0 0
          %941 = vmatprep.subr.bf16.mxu0 0
          %942 = vmatpush1.bf16.msra.mxu0 0
          %943 = vmatprep.subr.bf16.mxu0 0
          %944 = vmatpush1.bf16.msra.mxu0 0
          %945 = vmatprep.subr.bf16.mxu0 0
          %946 = vmatpush1.bf16.msra.mxu0 0
          %947 = vmatprep.subr.bf16.mxu0 0
          %948 = vmatpush1.bf16.msra.mxu0 0
          %949 = vmatprep.subr.bf16.mxu0 0
          %950 = vmatpush1.bf16.msra.mxu0 0
          %951 = vmatprep.mubr.bf16.mxu0 0
          %952 = vmatmul.mubr.bf16.gmra.mrb[0].mxu0 %v630
          %v953 = vpop.f32.mrb[0].mxu0
          %v954 = vadd.f32 0.0, %v953
          %v955 = vpop.f32.mrb[0].mxu0
          %v956 = vadd.f32 0.0, %v955
          %v957 = vpop.f32.mrb[0].mxu0
          %v958 = vadd.f32 0.0, %v957
          %v959 = vpop.f32.mrb[0].mxu0
          %v960 = vadd.f32 0.0, %v959
          %961 = vmatprep.mubr.bf16.mxu0 0
          %962 = vmatmul.mubr.bf16.gmra.mrb[0].mxu0 %v631
          %v963 = vpop.f32.mrb[0].mxu0
          %v964 = vadd.f32 0.0, %v963
          %v965 = vpop.f32.mrb[0].mxu0
          %v966 = vadd.f32 0.0, %v965
          %v967 = vpop.f32.mrb[0].mxu0
          %v968 = vadd.f32 0.0, %v967
          %v969 = vpop.f32.mrb[0].mxu0
          %v970 = vadd.f32 0.0, %v969
          %971 = vmatprep.mubr.bf16.mxu0 0
          %972 = vmatmul.mubr.bf16.gmra.mrb[0].mxu0 %v632
          %v973 = vpop.f32.mrb[0].mxu0
          %v974 = vadd.f32 0.0, %v973
          %v975 = vpop.f32.mrb[0].mxu0
          %v976 = vadd.f32 0.0, %v975
          %v977 = vpop.f32.mrb[0].mxu0
          %v978 = vadd.f32 0.0, %v977
          %v979 = vpop.f32.mrb[0].mxu0
          %v980 = vadd.f32 0.0, %v979
          %981 = vmatprep.mubr.bf16.mxu0 0
          %982 = vmatmul.mubr.bf16.gmra.mrb[0].mxu0 %v633
          %v983 = vpop.f32.mrb[0].mxu0
          %v984 = vadd.f32 0.0, %v983
          %v985 = vpop.f32.mrb[0].mxu0
          %v986 = vadd.f32 0.0, %v985
          %v987 = vpop.f32.mrb[0].mxu0
          %v988 = vadd.f32 0.0, %v987
          %v989 = vpop.f32.mrb[0].mxu0
          %v990 = vadd.f32 0.0, %v989
          %991 = vmatprep.mubr.bf16.mxu0 0
          %992 = vmatmul.mubr.bf16.gmra.mrb[0].mxu0 %v634
          %v993 = vpop.f32.mrb[0].mxu0
          %v994 = vadd.f32 0.0, %v993
          %v995 = vpop.f32.mrb[0].mxu0
          %v996 = vadd.f32 0.0, %v995
          %v997 = vpop.f32.mrb[0].mxu0
          %v998 = vadd.f32 0.0, %v997
          %v999 = vpop.f32.mrb[0].mxu0
          %v1000 = vadd.f32 0.0, %v999
          %1001 = vmatprep.mubr.bf16.mxu0 0
          %1002 = vmatmul.mubr.bf16.gmra.mrb[0].mxu0 %v635
          %v1003 = vpop.f32.mrb[0].mxu0
          %v1004 = vadd.f32 0.0, %v1003
          %v1005 = vpop.f32.mrb[0].mxu0
          %v1006 = vadd.f32 0.0, %v1005
          %v1007 = vpop.f32.mrb[0].mxu0
          %v1008 = vadd.f32 0.0, %v1007
          %v1009 = vpop.f32.mrb[0].mxu0
          %v1010 = vadd.f32 0.0, %v1009
          %1011 = vmatprep.mubr.bf16.mxu0 0
          %1012 = vmatmul.mubr.bf16.gmra.mrb[0].mxu0 %v636
          %v1013 = vpop.f32.mrb[0].mxu0
          %v1014 = vadd.f32 0.0, %v1013
          %v1015 = vpop.f32.mrb[0].mxu0
          %v1016 = vadd.f32 0.0, %v1015
          %v1017 = vpop.f32.mrb[0].mxu0
          %v1018 = vadd.f32 0.0, %v1017
          %v1019 = vpop.f32.mrb[0].mxu0
          %v1020 = vadd.f32 0.0, %v1019
          %1021 = vmatprep.mubr.bf16.mxu0 0
          %1022 = vmatmul.mubr.bf16.gmra.mrb[0].mxu0 %v637
          %v1023 = vpop.f32.mrb[0].mxu0
          %v1024 = vadd.f32 0.0, %v1023
          %v1025 = vpop.f32.mrb[0].mxu0
          %v1026 = vadd.f32 0.0, %v1025
          %v1027 = vpop.f32.mrb[0].mxu0
          %v1028 = vadd.f32 0.0, %v1027
          %v1029 = vpop.f32.mrb[0].mxu0
          %v1030 = vadd.f32 0.0, %v1029
          %1031 = vdwg.mxu0
          %v1032 = vxor.u32 %v841, 2147483648
          %v1033 = vxor.u32 %v843, 2147483648
          %v1034 = vxor.u32 %v845, 2147483648
          %v1035 = vxor.u32 %v847, 2147483648
          %v1036 = vxor.u32 %v851, 2147483648
          %v1037 = vxor.u32 %v853, 2147483648
          %v1038 = vxor.u32 %v855, 2147483648
          %v1039 = vxor.u32 %v857, 2147483648
          %v1040 = vxor.u32 %v861, 2147483648
          %v1041 = vxor.u32 %v863, 2147483648
          %v1042 = vxor.u32 %v865, 2147483648
          %v1043 = vxor.u32 %v867, 2147483648
          %v1044 = vxor.u32 %v871, 2147483648
          %v1045 = vxor.u32 %v873, 2147483648
          %v1046 = vxor.u32 %v875, 2147483648
          %v1047 = vxor.u32 %v877, 2147483648
          %v1048 = vxor.u32 %v881, 2147483648
          %v1049 = vxor.u32 %v883, 2147483648
          %v1050 = vxor.u32 %v885, 2147483648
          %v1051 = vxor.u32 %v887, 2147483648
          %v1052 = vxor.u32 %v891, 2147483648
          %v1053 = vxor.u32 %v893, 2147483648
          %v1054 = vxor.u32 %v895, 2147483648
          %v1055 = vxor.u32 %v897, 2147483648
          %v1056 = vxor.u32 %v901, 2147483648
          %v1057 = vxor.u32 %v903, 2147483648
          %v1058 = vxor.u32 %v905, 2147483648
          %v1059 = vxor.u32 %v907, 2147483648
          %v1060 = vxor.u32 %v911, 2147483648
          %v1061 = vxor.u32 %v913, 2147483648
          %v1062 = vxor.u32 %v915, 2147483648
          %v1063 = vxor.u32 %v917, 2147483648
          %v1064 = vmul.f32 %v1032, 1.442695
          %v1065 = vpow.pop %v1064
          %v1066 = vmul.f32 %v1033, 1.442695
          %v1067 = vpow.pop %v1066
          %v1068 = vmul.f32 %v1034, 1.442695
          %v1069 = vpow.pop %v1068
          %v1070 = vmul.f32 %v1035, 1.442695
          %v1071 = vpow.pop %v1070
          %v1072 = vmul.f32 %v1036, 1.442695
          %v1073 = vpow.pop %v1072
          %v1074 = vmul.f32 %v1037, 1.442695
          %v1075 = vpow.pop %v1074
          %v1076 = vmul.f32 %v1038, 1.442695
          %v1077 = vpow.pop %v1076
          %v1078 = vmul.f32 %v1039, 1.442695
          %v1079 = vpow.pop %v1078
          %v1080 = vmul.f32 %v1040, 1.442695
          %v1081 = vpow.pop %v1080
          %v1082 = vmul.f32 %v1041, 1.442695
          %v1083 = vpow.pop %v1082
          %v1084 = vmul.f32 %v1042, 1.442695
          %v1085 = vpow.pop %v1084
          %v1086 = vmul.f32 %v1043, 1.442695
          %v1087 = vpow.pop %v1086
          %v1088 = vmul.f32 %v1044, 1.442695
          %v1089 = vpow.pop %v1088
          %v1090 = vmul.f32 %v1045, 1.442695
          %v1091 = vpow.pop %v1090
          %v1092 = vmul.f32 %v1046, 1.442695
          %v1093 = vpow.pop %v1092
          %v1094 = vmul.f32 %v1047, 1.442695
          %v1095 = vpow.pop %v1094
          %v1096 = vmul.f32 %v1048, 1.442695
          %v1097 = vpow.pop %v1096
          %v1098 = vmul.f32 %v1049, 1.442695
          %v1099 = vpow.pop %v1098
          %v1100 = vmul.f32 %v1050, 1.442695
          %v1101 = vpow.pop %v1100
          %v1102 = vmul.f32 %v1051, 1.442695
          %v1103 = vpow.pop %v1102
          %v1104 = vmul.f32 %v1052, 1.442695
          %v1105 = vpow.pop %v1104
          %v1106 = vmul.f32 %v1053, 1.442695
          %v1107 = vpow.pop %v1106
          %v1108 = vmul.f32 %v1054, 1.442695
          %v1109 = vpow.pop %v1108
          %v1110 = vmul.f32 %v1055, 1.442695
          %v1111 = vpow.pop %v1110
          %v1112 = vmul.f32 %v1056, 1.442695
          %v1113 = vpow.pop %v1112
          %v1114 = vmul.f32 %v1057, 1.442695
          %v1115 = vpow.pop %v1114
          %v1116 = vmul.f32 %v1058, 1.442695
          %v1117 = vpow.pop %v1116
          %v1118 = vmul.f32 %v1059, 1.442695
          %v1119 = vpow.pop %v1118
          %v1120 = vmul.f32 %v1060, 1.442695
          %v1121 = vpow.pop %v1120
          %v1122 = vmul.f32 %v1061, 1.442695
          %v1123 = vpow.pop %v1122
          %v1124 = vmul.f32 %v1062, 1.442695
          %v1125 = vpow.pop %v1124
          %v1126 = vmul.f32 %v1063, 1.442695
          %v1127 = vpow.pop %v1126
          %v1128 = vadd.f32 %v1065, 1.0
          %v1129 = vadd.f32 %v1067, 1.0
          %v1130 = vadd.f32 %v1069, 1.0
          %v1131 = vadd.f32 %v1071, 1.0
          %v1132 = vadd.f32 %v1073, 1.0
          %v1133 = vadd.f32 %v1075, 1.0
          %v1134 = vadd.f32 %v1077, 1.0
          %v1135 = vadd.f32 %v1079, 1.0
          %v1136 = vadd.f32 %v1081, 1.0
          %v1137 = vadd.f32 %v1083, 1.0
          %v1138 = vadd.f32 %v1085, 1.0
          %v1139 = vadd.f32 %v1087, 1.0
          %v1140 = vadd.f32 %v1089, 1.0
          %v1141 = vadd.f32 %v1091, 1.0
          %v1142 = vadd.f32 %v1093, 1.0
          %v1143 = vadd.f32 %v1095, 1.0
          %v1144 = vadd.f32 %v1097, 1.0
          %v1145 = vadd.f32 %v1099, 1.0
          %v1146 = vadd.f32 %v1101, 1.0
          %v1147 = vadd.f32 %v1103, 1.0
          %v1148 = vadd.f32 %v1105, 1.0
          %v1149 = vadd.f32 %v1107, 1.0
          %v1150 = vadd.f32 %v1109, 1.0
          %v1151 = vadd.f32 %v1111, 1.0
          %v1152 = vadd.f32 %v1113, 1.0
          %v1153 = vadd.f32 %v1115, 1.0
          %v1154 = vadd.f32 %v1117, 1.0
          %v1155 = vadd.f32 %v1119, 1.0
          %v1156 = vadd.f32 %v1121, 1.0
          %v1157 = vadd.f32 %v1123, 1.0
          %v1158 = vadd.f32 %v1125, 1.0
          %v1159 = vadd.f32 %v1127, 1.0
          %v1160 = vrcp.pop %v1128
          %v1161 = vmul.f32 1.0, %v1160
          %v1162 = vrcp.pop %v1129
          %v1163 = vmul.f32 1.0, %v1162
          %v1164 = vrcp.pop %v1130
          %v1165 = vmul.f32 1.0, %v1164
          %v1166 = vrcp.pop %v1131
          %v1167 = vmul.f32 1.0, %v1166
          %v1168 = vrcp.pop %v1132
          %v1169 = vmul.f32 1.0, %v1168
          %v1170 = vrcp.pop %v1133
          %v1171 = vmul.f32 1.0, %v1170
          %v1172 = vrcp.pop %v1134
          %v1173 = vmul.f32 1.0, %v1172
          %v1174 = vrcp.pop %v1135
          %v1175 = vmul.f32 1.0, %v1174
          %v1176 = vrcp.pop %v1136
          %v1177 = vmul.f32 1.0, %v1176
          %v1178 = vrcp.pop %v1137
          %v1179 = vmul.f32 1.0, %v1178
          %v1180 = vrcp.pop %v1138
          %v1181 = vmul.f32 1.0, %v1180
          %v1182 = vrcp.pop %v1139
          %v1183 = vmul.f32 1.0, %v1182
          %v1184 = vrcp.pop %v1140
          %v1185 = vmul.f32 1.0, %v1184
          %v1186 = vrcp.pop %v1141
          %v1187 = vmul.f32 1.0, %v1186
          %v1188 = vrcp.pop %v1142
          %v1189 = vmul.f32 1.0, %v1188
          %v1190 = vrcp.pop %v1143
          %v1191 = vmul.f32 1.0, %v1190
          %v1192 = vrcp.pop %v1144
          %v1193 = vmul.f32 1.0, %v1192
          %v1194 = vrcp.pop %v1145
          %v1195 = vmul.f32 1.0, %v1194
          %v1196 = vrcp.pop %v1146
          %v1197 = vmul.f32 1.0, %v1196
          %v1198 = vrcp.pop %v1147
          %v1199 = vmul.f32 1.0, %v1198
          %v1200 = vrcp.pop %v1148
          %v1201 = vmul.f32 1.0, %v1200
          %v1202 = vrcp.pop %v1149
          %v1203 = vmul.f32 1.0, %v1202
          %v1204 = vrcp.pop %v1150
          %v1205 = vmul.f32 1.0, %v1204
          %v1206 = vrcp.pop %v1151
          %v1207 = vmul.f32 1.0, %v1206
          %v1208 = vrcp.pop %v1152
          %v1209 = vmul.f32 1.0, %v1208
          %v1210 = vrcp.pop %v1153
          %v1211 = vmul.f32 1.0, %v1210
          %v1212 = vrcp.pop %v1154
          %v1213 = vmul.f32 1.0, %v1212
          %v1214 = vrcp.pop %v1155
          %v1215 = vmul.f32 1.0, %v1214
          %v1216 = vrcp.pop %v1156
          %v1217 = vmul.f32 1.0, %v1216
          %v1218 = vrcp.pop %v1157
          %v1219 = vmul.f32 1.0, %v1218
          %v1220 = vrcp.pop %v1158
          %v1221 = vmul.f32 1.0, %v1220
          %v1222 = vrcp.pop %v1159
          %v1223 = vmul.f32 1.0, %v1222
          %v1224 = vmul.f32 %v841, %v1161
          %v1225 = vmul.f32 %v843, %v1163
          %v1226 = vmul.f32 %v845, %v1165
          %v1227 = vmul.f32 %v847, %v1167
          %v1228 = vmul.f32 %v851, %v1169
          %v1229 = vmul.f32 %v853, %v1171
          %v1230 = vmul.f32 %v855, %v1173
          %v1231 = vmul.f32 %v857, %v1175
          %v1232 = vmul.f32 %v861, %v1177
          %v1233 = vmul.f32 %v863, %v1179
          %v1234 = vmul.f32 %v865, %v1181
          %v1235 = vmul.f32 %v867, %v1183
          %v1236 = vmul.f32 %v871, %v1185
          %v1237 = vmul.f32 %v873, %v1187
          %v1238 = vmul.f32 %v875, %v1189
          %v1239 = vmul.f32 %v877, %v1191
          %v1240 = vmul.f32 %v881, %v1193
          %v1241 = vmul.f32 %v883, %v1195
          %v1242 = vmul.f32 %v885, %v1197
          %v1243 = vmul.f32 %v887, %v1199
          %v1244 = vmul.f32 %v891, %v1201
          %v1245 = vmul.f32 %v893, %v1203
          %v1246 = vmul.f32 %v895, %v1205
          %v1247 = vmul.f32 %v897, %v1207
          %v1248 = vmul.f32 %v901, %v1209
          %v1249 = vmul.f32 %v903, %v1211
          %v1250 = vmul.f32 %v905, %v1213
          %v1251 = vmul.f32 %v907, %v1215
          %v1252 = vmul.f32 %v911, %v1217
          %v1253 = vmul.f32 %v913, %v1219
          %v1254 = vmul.f32 %v915, %v1221
          %v1255 = vmul.f32 %v917, %v1223
          %v1256 = vmul.f32 %v1224, %v954
          %v1257 = vmul.f32 %v1225, %v956
          %v1258 = vmul.f32 %v1226, %v958
          %v1259 = vmul.f32 %v1227, %v960
          %v1260 = vmul.f32 %v1228, %v964
          %v1261 = vmul.f32 %v1229, %v966
          %v1262 = vmul.f32 %v1230, %v968
          %v1263 = vmul.f32 %v1231, %v970
          %v1264 = vmul.f32 %v1232, %v974
          %v1265 = vmul.f32 %v1233, %v976
          %v1266 = vmul.f32 %v1234, %v978
          %v1267 = vmul.f32 %v1235, %v980
          %v1268 = vmul.f32 %v1236, %v984
          %v1269 = vmul.f32 %v1237, %v986
          %v1270 = vmul.f32 %v1238, %v988
          %v1271 = vmul.f32 %v1239, %v990
          %v1272 = vmul.f32 %v1240, %v994
          %v1273 = vmul.f32 %v1241, %v996
          %v1274 = vmul.f32 %v1242, %v998
          %v1275 = vmul.f32 %v1243, %v1000
          %v1276 = vmul.f32 %v1244, %v1004
          %v1277 = vmul.f32 %v1245, %v1006
          %v1278 = vmul.f32 %v1246, %v1008
          %v1279 = vmul.f32 %v1247, %v1010
          %v1280 = vmul.f32 %v1248, %v1014
          %v1281 = vmul.f32 %v1249, %v1016
          %v1282 = vmul.f32 %v1250, %v1018
          %v1283 = vmul.f32 %v1251, %v1020
          %v1284 = vmul.f32 %v1252, %v1024
          %v1285 = vmul.f32 %v1253, %v1026
          %v1286 = vmul.f32 %v1254, %v1028
          %v1287 = vmul.f32 %v1255, %v1030
          %v1288 = vpack.c.bf16 %v1258, %v1256
          %v1289 = vpack.c.bf16 %v1259, %v1257
          %v1290 = vpack.c.bf16 %v1262, %v1260
          %v1291 = vpack.c.bf16 %v1263, %v1261
          %v1292 = vpack.c.bf16 %v1266, %v1264
          %v1293 = vpack.c.bf16 %v1267, %v1265
          %v1294 = vpack.c.bf16 %v1270, %v1268
          %v1295 = vpack.c.bf16 %v1271, %v1269
          %v1296 = vpack.c.bf16 %v1274, %v1272
          %v1297 = vpack.c.bf16 %v1275, %v1273
          %v1298 = vpack.c.bf16 %v1278, %v1276
          %v1299 = vpack.c.bf16 %v1279, %v1277
          %v1300 = vpack.c.bf16 %v1282, %v1280
          %v1301 = vpack.c.bf16 %v1283, %v1281
          %v1302 = vpack.c.bf16 %v1286, %v1284
          %v1303 = vpack.c.bf16 %v1287, %v1285
          %v1336 = vunpack.c.l.b16 %v566
          %v1337 = vunpack.c.l.b16 %v567
          %v1338 = vunpack.c.l.b16 %v568
          %v1339 = vunpack.c.l.b16 %v569
          %v1340 = vunpack.c.l.b16 %v570
          %v1341 = vunpack.c.l.b16 %v571
          %v1342 = vunpack.c.l.b16 %v572
          %v1343 = vunpack.c.l.b16 %v573
          %v1344 = vunpack.c.l.b16 %v574
          %v1345 = vunpack.c.l.b16 %v575
          %v1346 = vunpack.c.l.b16 %v576
          %v1347 = vunpack.c.l.b16 %v577
          %v1348 = vunpack.c.l.b16 %v578
          %v1349 = vunpack.c.l.b16 %v579
          %v1350 = vunpack.c.l.b16 %v580
          %v1351 = vunpack.c.l.b16 %v581
          %v1352 = vunpack.c.l.b16 %v582
          %v1353 = vunpack.c.l.b16 %v583
          %v1354 = vunpack.c.l.b16 %v584
          %v1355 = vunpack.c.l.b16 %v585
          %v1356 = vunpack.c.l.b16 %v586
          %v1357 = vunpack.c.l.b16 %v587
          %v1358 = vunpack.c.l.b16 %v588
          %v1359 = vunpack.c.l.b16 %v589
          %v1360 = vunpack.c.l.b16 %v590
          %v1361 = vunpack.c.l.b16 %v591
          %v1362 = vunpack.c.l.b16 %v592
          %v1363 = vunpack.c.l.b16 %v593
          %v1364 = vunpack.c.l.b16 %v594
          %v1365 = vunpack.c.l.b16 %v595
          %v1366 = vunpack.c.l.b16 %v596
          %v1367 = vunpack.c.l.b16 %v597
          %v1368 = vpack.c.b16 %v1337, %v1336
          %v1369 = vpack.c.b16 %v1339, %v1338
          %v1370 = vpack.c.b16 %v1341, %v1340
          %v1371 = vpack.c.b16 %v1343, %v1342
          %v1372 = vpack.c.b16 %v1345, %v1344
          %v1373 = vpack.c.b16 %v1347, %v1346
          %v1374 = vpack.c.b16 %v1349, %v1348
          %v1375 = vpack.c.b16 %v1351, %v1350
          %v1376 = vpack.c.b16 %v1353, %v1352
          %v1377 = vpack.c.b16 %v1355, %v1354
          %v1378 = vpack.c.b16 %v1357, %v1356
          %v1379 = vpack.c.b16 %v1359, %v1358
          %v1380 = vpack.c.b16 %v1361, %v1360
          %v1381 = vpack.c.b16 %v1363, %v1362
          %v1382 = vpack.c.b16 %v1365, %v1364
          %v1383 = vpack.c.b16 %v1367, %v1366
          %1400 = vmatprep.subr.bf16.mxu0 0
          %1401 = vmatpush1.bf16.msra.mxu0 %v1368
          %1402 = vmatprep.subr.bf16.mxu0 0
          %1403 = vmatpush1.bf16.msra.mxu0 %v1369
          %1404 = vmatprep.subr.bf16.mxu0 0
          %1405 = vmatpush1.bf16.msra.mxu0 %v1370
          %1406 = vmatprep.subr.bf16.mxu0 0
          %1407 = vmatpush1.bf16.msra.mxu0 %v1371
          %1408 = vmatprep.subr.bf16.mxu0 0
          %1409 = vmatpush1.bf16.msra.mxu0 %v1372
          %1410 = vmatprep.subr.bf16.mxu0 0
          %1411 = vmatpush1.bf16.msra.mxu0 %v1373
          %1412 = vmatprep.subr.bf16.mxu0 0
          %1413 = vmatpush1.bf16.msra.mxu0 %v1374
          %1414 = vmatprep.subr.bf16.mxu0 0
          %1415 = vmatpush1.bf16.msra.mxu0 %v1375
          %1416 = vmatprep.subr.bf16.mxu0 0
          %1417 = vmatpush1.bf16.msra.mxu0 %v1376
          %1418 = vmatprep.subr.bf16.mxu0 0
          %1419 = vmatpush1.bf16.msra.mxu0 %v1377
          %1420 = vmatprep.subr.bf16.mxu0 0
          %1421 = vmatpush1.bf16.msra.mxu0 %v1378
          %1422 = vmatprep.subr.bf16.mxu0 0
          %1423 = vmatpush1.bf16.msra.mxu0 %v1379
          %1424 = vmatprep.subr.bf16.mxu0 0
          %1425 = vmatpush1.bf16.msra.mxu0 %v1380
          %1426 = vmatprep.subr.bf16.mxu0 0
          %1427 = vmatpush1.bf16.msra.mxu0 %v1381
          %1428 = vmatprep.subr.bf16.mxu0 0
          %1429 = vmatpush1.bf16.msra.mxu0 %v1382
          %1430 = vmatprep.subr.bf16.mxu0 0
          %1431 = vmatpush1.bf16.msra.mxu0 %v1383
          %1432 = vmatprep.mubr.bf16.mxu0 %v1289
          %1433 = vmatmul.mubr.bf16.gmra.mrb[0].mxu0 %v1288
          %v1434 = vpop.f32.mrb[0].mxu0
          %v1435 = vadd.f32 0.0, %v1434
          %v1436 = vpop.f32.mrb[0].mxu0
          %v1437 = vpop.f32.mrb[0].mxu0
          %v1438 = vadd.f32 0.0, %v1437
          %v1439 = vpop.f32.mrb[0].mxu0
          %1440 = vmatprep.mubr.bf16.mxu0 %v1291
          %1441 = vmatmul.mubr.bf16.gmra.mrb[0].mxu0 %v1290
          %v1442 = vpop.f32.mrb[0].mxu0
          %v1443 = vadd.f32 0.0, %v1442
          %v1444 = vpop.f32.mrb[0].mxu0
          %v1445 = vpop.f32.mrb[0].mxu0
          %v1446 = vadd.f32 0.0, %v1445
          %v1447 = vpop.f32.mrb[0].mxu0
          %1448 = vmatprep.mubr.bf16.mxu0 %v1293
          %1449 = vmatmul.mubr.bf16.gmra.mrb[0].mxu0 %v1292
          %v1450 = vpop.f32.mrb[0].mxu0
          %v1451 = vadd.f32 0.0, %v1450
          %v1452 = vpop.f32.mrb[0].mxu0
          %v1453 = vpop.f32.mrb[0].mxu0
          %v1454 = vadd.f32 0.0, %v1453
          %v1455 = vpop.f32.mrb[0].mxu0
          %1456 = vmatprep.mubr.bf16.mxu0 %v1295
          %1457 = vmatmul.mubr.bf16.gmra.mrb[0].mxu0 %v1294
          %v1458 = vpop.f32.mrb[0].mxu0
          %v1459 = vadd.f32 0.0, %v1458
          %v1460 = vpop.f32.mrb[0].mxu0
          %v1461 = vpop.f32.mrb[0].mxu0
          %v1462 = vadd.f32 0.0, %v1461
          %v1463 = vpop.f32.mrb[0].mxu0
          %1464 = vmatprep.mubr.bf16.mxu0 %v1297
          %1465 = vmatmul.mubr.bf16.gmra.mrb[0].mxu0 %v1296
          %v1466 = vpop.f32.mrb[0].mxu0
          %v1467 = vadd.f32 0.0, %v1466
          %v1468 = vpop.f32.mrb[0].mxu0
          %v1469 = vpop.f32.mrb[0].mxu0
          %v1470 = vadd.f32 0.0, %v1469
          %v1471 = vpop.f32.mrb[0].mxu0
          %1472 = vmatprep.mubr.bf16.mxu0 %v1299
          %1473 = vmatmul.mubr.bf16.gmra.mrb[0].mxu0 %v1298
          %v1474 = vpop.f32.mrb[0].mxu0
          %v1475 = vadd.f32 0.0, %v1474
          %v1476 = vpop.f32.mrb[0].mxu0
          %v1477 = vpop.f32.mrb[0].mxu0
          %v1478 = vadd.f32 0.0, %v1477
          %v1479 = vpop.f32.mrb[0].mxu0
          %1480 = vmatprep.mubr.bf16.mxu0 %v1301
          %1481 = vmatmul.mubr.bf16.gmra.mrb[0].mxu0 %v1300
          %v1482 = vpop.f32.mrb[0].mxu0
          %v1483 = vadd.f32 0.0, %v1482
          %v1484 = vpop.f32.mrb[0].mxu0
          %v1485 = vpop.f32.mrb[0].mxu0
          %v1486 = vadd.f32 0.0, %v1485
          %v1487 = vpop.f32.mrb[0].mxu0
          %1488 = vmatprep.mubr.bf16.mxu0 %v1303
          %1489 = vmatmul.mubr.bf16.gmra.mrb[0].mxu0 %v1302
          %v1490 = vpop.f32.mrb[0].mxu0
          %v1491 = vadd.f32 0.0, %v1490
          %v1492 = vpop.f32.mrb[0].mxu0
          %v1493 = vpop.f32.mrb[0].mxu0
          %v1494 = vadd.f32 0.0, %v1493
          %v1495 = vpop.f32.mrb[0].mxu0
          %1496 = vdwg.mxu0
          %v1497 = vld [vmem:[#allocation3] sm:$0xff]
          %v1498 = vld [vmem:[#allocation3 + $0x8] sm:$0xff]
          %v1499 = vld [vmem:[#allocation3 + $0x10] sm:$0xff]
          %v1500 = vld [vmem:[#allocation3 + $0x18] sm:$0xff]
          %v1501 = vld [vmem:[#allocation3 + $0x20] sm:$0xff]
          %v1502 = vld [vmem:[#allocation3 + $0x28] sm:$0xff]
          %v1503 = vld [vmem:[#allocation3 + $0x30] sm:$0xff]
          %v1504 = vld [vmem:[#allocation3 + $0x38] sm:$0xff]
          %v1505 = vld [vmem:[#allocation3 + $0x40] sm:$0xff]
          %v1506 = vld [vmem:[#allocation3 + $0x48] sm:$0xff]
          %v1507 = vld [vmem:[#allocation3 + $0x50] sm:$0xff]
          %v1508 = vld [vmem:[#allocation3 + $0x58] sm:$0xff]
          %v1509 = vld [vmem:[#allocation3 + $0x60] sm:$0xff]
          %v1510 = vld [vmem:[#allocation3 + $0x68] sm:$0xff]
          %v1511 = vld [vmem:[#allocation3 + $0x70] sm:$0xff]
          %v1512 = vld [vmem:[#allocation3 + $0x78] sm:$0xff]
          %1514 = vset.pattern.permute.xlu0 0
          %1515 = vperm.xlu0 %1514, %v1497
          %v1516 = vpop.permute.xlu0 %1515
          %1519 = vset.pattern.permute.xlu0 0
          %1520 = vperm.xlu0 %1519, %v1498
          %v1521 = vpop.permute.xlu0 %1520
          %1524 = vset.pattern.permute.xlu0 0
          %1525 = vperm.xlu0 %1524, %v1499
          %v1526 = vpop.permute.xlu0 %1525
          %1529 = vset.pattern.permute.xlu0 0
          %1530 = vperm.xlu0 %1529, %v1500
          %v1531 = vpop.permute.xlu0 %1530
          %1534 = vset.pattern.permute.xlu0 0
          %1535 = vperm.xlu0 %1534, %v1501
          %v1536 = vpop.permute.xlu0 %1535
          %1539 = vset.pattern.permute.xlu0 0
          %1540 = vperm.xlu0 %1539, %v1502
          %v1541 = vpop.permute.xlu0 %1540
          %1544 = vset.pattern.permute.xlu0 0
          %1545 = vperm.xlu0 %1544, %v1503
          %v1546 = vpop.permute.xlu0 %1545
          %1549 = vset.pattern.permute.xlu0 0
          %1550 = vperm.xlu0 %1549, %v1504
          %v1551 = vpop.permute.xlu0 %1550
          %1554 = vset.pattern.permute.xlu0 0
          %1555 = vperm.xlu0 %1554, %v1505
          %v1556 = vpop.permute.xlu0 %1555
          %1559 = vset.pattern.permute.xlu0 0
          %1560 = vperm.xlu0 %1559, %v1506
          %v1561 = vpop.permute.xlu0 %1560
          %1564 = vset.pattern.permute.xlu0 0
          %1565 = vperm.xlu0 %1564, %v1507
          %v1566 = vpop.permute.xlu0 %1565
          %1569 = vset.pattern.permute.xlu0 0
          %1570 = vperm.xlu0 %1569, %v1508
          %v1571 = vpop.permute.xlu0 %1570
          %1574 = vset.pattern.permute.xlu0 0
          %1575 = vperm.xlu0 %1574, %v1509
          %v1576 = vpop.permute.xlu0 %1575
          %1579 = vset.pattern.permute.xlu0 0
          %1580 = vperm.xlu0 %1579, %v1510
          %v1581 = vpop.permute.xlu0 %1580
          %1584 = vset.pattern.permute.xlu0 0
          %1585 = vperm.xlu0 %1584, %v1511
          %v1586 = vpop.permute.xlu0 %1585
          %1589 = vset.pattern.permute.xlu0 0
          %1590 = vperm.xlu0 %1589, %v1512
          %v1591 = vpop.permute.xlu0 %1590
          %v1593 = vmul.f32 %v1516, %v1435
          %v1594 = vmul.f32 %v1521, %v1438
          %v1595 = vmul.f32 %v1526, %v1443
          %v1596 = vmul.f32 %v1531, %v1446
          %v1597 = vmul.f32 %v1536, %v1451
          %v1598 = vmul.f32 %v1541, %v1454
          %v1599 = vmul.f32 %v1546, %v1459
          %v1600 = vmul.f32 %v1551, %v1462
          %v1601 = vmul.f32 %v1556, %v1467
          %v1602 = vmul.f32 %v1561, %v1470
          %v1603 = vmul.f32 %v1566, %v1475
          %v1604 = vmul.f32 %v1571, %v1478
          %v1605 = vmul.f32 %v1576, %v1483
          %v1606 = vmul.f32 %v1581, %v1486
          %v1607 = vmul.f32 %v1586, %v1491
          %v1608 = vmul.f32 %v1591, %v1494
          // Predicated region
          $region57: #{moe_wrapper_forward.1} parent=51 // pred_check
            _
          $region58: #{moe_wrapper_forward.1} parent=51 // pred_check_branch
            %1610 = sbr.rel (%p387) target = $region60
          $region59: #{moe_wrapper_forward.1} parent=51 // pred_region
            %1611 = vst [vmem:[#allocation2] sm:$0xff] %v1593
            %1612 = vst [vmem:[#allocation2 + $0x8] sm:$0xff] %v1594
            %1613 = vst [vmem:[#allocation2 + $0x10] sm:$0xff] %v1595
            %1614 = vst [vmem:[#allocation2 + $0x18] sm:$0xff] %v1596
            %1615 = vst [vmem:[#allocation2 + $0x20] sm:$0xff] %v1597
            %1616 = vst [vmem:[#allocation2 + $0x28] sm:$0xff] %v1598
            %1617 = vst [vmem:[#allocation2 + $0x30] sm:$0xff] %v1599
            %1618 = vst [vmem:[#allocation2 + $0x38] sm:$0xff] %v1600
            %1619 = vst [vmem:[#allocation2 + $0x40] sm:$0xff] %v1601
            %1620 = vst [vmem:[#allocation2 + $0x48] sm:$0xff] %v1602
            %1621 = vst [vmem:[#allocation2 + $0x50] sm:$0xff] %v1603
            %1622 = vst [vmem:[#allocation2 + $0x58] sm:$0xff] %v1604
            %1623 = vst [vmem:[#allocation2 + $0x60] sm:$0xff] %v1605
            %1624 = vst [vmem:[#allocation2 + $0x68] sm:$0xff] %v1606
            %1625 = vst [vmem:[#allocation2 + $0x70] sm:$0xff] %v1607
            %1626 = vst [vmem:[#allocation2 + $0x78] sm:$0xff] %v1608
          $region60: #{moe_wrapper_forward.1} parent=51 // pred_fallthru
            _
          %p1627 = pneg %p388
          // Predicated region
          $region61: #{moe_wrapper_forward.1} parent=51 // pred_check
            _
          $region62: #{moe_wrapper_forward.1} parent=51 // pred_check_branch
            %1629 = sbr.rel (%p388) target = $region64
          $region63: #{moe_wrapper_forward.1} parent=51 // pred_region
            %v1630 = vld [vmem:[#allocation2] sm:$0xff]
            %v1631 = vld [vmem:[#allocation2 + $0x8] sm:$0xff]
            %v1632 = vld [vmem:[#allocation2 + $0x10] sm:$0xff]
            %v1633 = vld [vmem:[#allocation2 + $0x18] sm:$0xff]
            %v1634 = vld [vmem:[#allocation2 + $0x20] sm:$0xff]
            %v1635 = vld [vmem:[#allocation2 + $0x28] sm:$0xff]
            %v1636 = vld [vmem:[#allocation2 + $0x30] sm:$0xff]
            %v1637 = vld [vmem:[#allocation2 + $0x38] sm:$0xff]
            %v1638 = vld [vmem:[#allocation2 + $0x40] sm:$0xff]
            %v1639 = vld [vmem:[#allocation2 + $0x48] sm:$0xff]
            %v1640 = vld [vmem:[#allocation2 + $0x50] sm:$0xff]
            %v1641 = vld [vmem:[#allocation2 + $0x58] sm:$0xff]
            %v1642 = vld [vmem:[#allocation2 + $0x60] sm:$0xff]
            %v1643 = vld [vmem:[#allocation2 + $0x68] sm:$0xff]
            %v1644 = vld [vmem:[#allocation2 + $0x70] sm:$0xff]
            %v1645 = vld [vmem:[#allocation2 + $0x78] sm:$0xff]
            %v1646 = vadd.f32 %v1630, %v1593
            %v1647 = vadd.f32 %v1631, %v1594
            %v1648 = vadd.f32 %v1632, %v1595
            %v1649 = vadd.f32 %v1633, %v1596
            %v1650 = vadd.f32 %v1634, %v1597
            %v1651 = vadd.f32 %v1635, %v1598
            %v1652 = vadd.f32 %v1636, %v1599
            %v1653 = vadd.f32 %v1637, %v1600
            %v1654 = vadd.f32 %v1638, %v1601
            %v1655 = vadd.f32 %v1639, %v1602
            %v1656 = vadd.f32 %v1640, %v1603
            %v1657 = vadd.f32 %v1641, %v1604
            %v1658 = vadd.f32 %v1642, %v1605
            %v1659 = vadd.f32 %v1643, %v1606
            %v1660 = vadd.f32 %v1644, %v1607
            %v1661 = vadd.f32 %v1645, %v1608
            %1662 = vst [vmem:[#allocation2] sm:$0xff] %v1646
            %1663 = vst [vmem:[#allocation2 + $0x8] sm:$0xff] %v1647
            %1664 = vst [vmem:[#allocation2 + $0x10] sm:$0xff] %v1648
            %1665 = vst [vmem:[#allocation2 + $0x18] sm:$0xff] %v1649
            %1666 = vst [vmem:[#allocation2 + $0x20] sm:$0xff] %v1650
            %1667 = vst [vmem:[#allocation2 + $0x28] sm:$0xff] %v1651
            %1668 = vst [vmem:[#allocation2 + $0x30] sm:$0xff] %v1652
            %1669 = vst [vmem:[#allocation2 + $0x38] sm:$0xff] %v1653
            %1670 = vst [vmem:[#allocation2 + $0x40] sm:$0xff] %v1654
            %1671 = vst [vmem:[#allocation2 + $0x48] sm:$0xff] %v1655
            %1672 = vst [vmem:[#allocation2 + $0x50] sm:$0xff] %v1656
            %1673 = vst [vmem:[#allocation2 + $0x58] sm:$0xff] %v1657
            %1674 = vst [vmem:[#allocation2 + $0x60] sm:$0xff] %v1658
            %1675 = vst [vmem:[#allocation2 + $0x68] sm:$0xff] %v1659
            %1676 = vst [vmem:[#allocation2 + $0x70] sm:$0xff] %v1660
            %1677 = vst [vmem:[#allocation2 + $0x78] sm:$0xff] %v1661
          $region64: #{moe_wrapper_forward.1} parent=51 // pred_fallthru
            _
        $region52: #{moe_wrapper_forward.1} parent=35 // pred_fallthru
          _
        %p1678 = scmp.eq.s32.totalorder %s42, 7
        %p1679 = pnand %p1678, %p386
        %p1680 = pneg %p1679
        // Predicated region
        $region65: #{moe_wrapper_forward.1} parent=35 // pred_check
          _
        $region66: #{moe_wrapper_forward.1} parent=35 // pred_check_branch
          %1682 = sbr.rel (%p1679) target = $region68
        $region67: #{moe_wrapper_forward.1} parent=35 // pred_region
          %v1683 = vld [vmem:[#allocation2] sm:$0xff]
          %v1684 = vld [vmem:[#allocation2 + $0x8] sm:$0xff]
          %v1685 = vld [vmem:[#allocation2 + $0x10] sm:$0xff]
          %v1686 = vld [vmem:[#allocation2 + $0x18] sm:$0xff]
          %v1687 = vld [vmem:[#allocation2 + $0x20] sm:$0xff]
          %v1688 = vld [vmem:[#allocation2 + $0x28] sm:$0xff]
          %v1689 = vld [vmem:[#allocation2 + $0x30] sm:$0xff]
          %v1690 = vld [vmem:[#allocation2 + $0x38] sm:$0xff]
          %v1691 = vld [vmem:[#allocation2 + $0x40] sm:$0xff]
          %v1692 = vld [vmem:[#allocation2 + $0x48] sm:$0xff]
          %v1693 = vld [vmem:[#allocation2 + $0x50] sm:$0xff]
          %v1694 = vld [vmem:[#allocation2 + $0x58] sm:$0xff]
          %v1695 = vld [vmem:[#allocation2 + $0x60] sm:$0xff]
          %v1696 = vld [vmem:[#allocation2 + $0x68] sm:$0xff]
          %v1697 = vld [vmem:[#allocation2 + $0x70] sm:$0xff]
          %v1698 = vld [vmem:[#allocation2 + $0x78] sm:$0xff]
          %v1699 = vpack.c.bf16 %v1684, %v1683
          %v1700 = vpack.c.bf16 %v1686, %v1685
          %v1701 = vpack.c.bf16 %v1688, %v1687
          %v1702 = vpack.c.bf16 %v1690, %v1689
          %v1703 = vpack.c.bf16 %v1692, %v1691
          %v1704 = vpack.c.bf16 %v1694, %v1693
          %v1705 = vpack.c.bf16 %v1696, %v1695
          %v1706 = vpack.c.bf16 %v1698, %v1697
          %v1715 = vunpack.c.l.b16 %v1699
          %v1716 = vunpack.c.h.b16 %v1699
          %v1717 = vunpack.c.l.b16 %v1700
          %v1718 = vunpack.c.h.b16 %v1700
          %v1719 = vunpack.c.l.b16 %v1701
          %v1720 = vunpack.c.h.b16 %v1701
          %v1721 = vunpack.c.l.b16 %v1702
          %v1722 = vunpack.c.h.b16 %v1702
          %v1723 = vunpack.c.l.b16 %v1703
          %v1724 = vunpack.c.h.b16 %v1703
          %v1725 = vunpack.c.l.b16 %v1704
          %v1726 = vunpack.c.h.b16 %v1704
          %v1727 = vunpack.c.l.b16 %v1705
          %v1728 = vunpack.c.h.b16 %v1705
          %v1729 = vunpack.c.l.b16 %v1706
          %v1730 = vunpack.c.h.b16 %v1706
          %v1731 = vpack.c.b16 %v1715, %v1715
          %v1732 = vpack.c.b16 %v1716, %v1716
          %v1733 = vpack.c.b16 %v1717, %v1717
          %v1734 = vpack.c.b16 %v1718, %v1718
          %v1735 = vpack.c.b16 %v1719, %v1719
          %v1736 = vpack.c.b16 %v1720, %v1720
          %v1737 = vpack.c.b16 %v1721, %v1721
          %v1738 = vpack.c.b16 %v1722, %v1722
          %v1739 = vpack.c.b16 %v1723, %v1723
          %v1740 = vpack.c.b16 %v1724, %v1724
          %v1741 = vpack.c.b16 %v1725, %v1725
          %v1742 = vpack.c.b16 %v1726, %v1726
          %v1743 = vpack.c.b16 %v1727, %v1727
          %v1744 = vpack.c.b16 %v1728, %v1728
          %v1745 = vpack.c.b16 %v1729, %v1729
          %v1746 = vpack.c.b16 %v1730, %v1730
          %1763 = vst [vmem:[%s356] sm:$0xf] %v1731
          %1764 = vst [vmem:[%s356 + $0x4] sm:$0xf] %v1732
          %1765 = vst [vmem:[%s356 + $0x8] sm:$0xf] %v1733
          %1766 = vst [vmem:[%s356 + $0xc] sm:$0xf] %v1734
          %1767 = vst [vmem:[%s356 + $0x10] sm:$0xf] %v1735
          %1768 = vst [vmem:[%s356 + $0x14] sm:$0xf] %v1736
          %1769 = vst [vmem:[%s356 + $0x18] sm:$0xf] %v1737
          %1770 = vst [vmem:[%s356 + $0x1c] sm:$0xf] %v1738
          %1771 = vst [vmem:[%s356 + $0x20] sm:$0xf] %v1739
          %1772 = vst [vmem:[%s356 + $0x24] sm:$0xf] %v1740
          %1773 = vst [vmem:[%s356 + $0x28] sm:$0xf] %v1741
          %1774 = vst [vmem:[%s356 + $0x2c] sm:$0xf] %v1742
          %1775 = vst [vmem:[%s356 + $0x30] sm:$0xf] %v1743
          %1776 = vst [vmem:[%s356 + $0x34] sm:$0xf] %v1744
          %1777 = vst [vmem:[%s356 + $0x38] sm:$0xf] %v1745
          %1778 = vst [vmem:[%s356 + $0x3c] sm:$0xf] %v1746
        $region68: #{moe_wrapper_forward.1} parent=35 // pred_fallthru
          _
        %s1779 = sand.u32 %s191, 1
        %s1780 = scalar_lea.sflag [#allocation9], %s1779
        %s1781 = sand.u32 %s191, 1
        %s1782 = smul.addr %s1781, 64
        %s1783 = scalar_lea.vmem [#allocation12], %s1782
        // Predicated region
        $region69: #{moe_wrapper_forward.1} parent=35 // pred_check
          %p1784 = pneg %p201
        $region70: #{moe_wrapper_forward.1} parent=35 // pred_check_branch
          %1786 = sbr.rel (%p1784) target = $region72
        $region71: #{moe_wrapper_forward.1} parent=35 // pred_region
          %s1787 = smul.u32 16, %s41
          %s1789 = ssub.s32 1024, 1024
          %1790 = vsyncadd %s1780, %s1789
          %s1791 = smul.addr %s1787, 64
          %s1792 = scalar_lea.hbm %s6, %s1791
          %s1793 = sshll.u32 %s1783, 4
          %s1794 = int_to_ptr.vmem [resolvable:$true] %s1793
          %1799 = dma.vmem_to_hbm [thread:$0]  %s1794, 1024, %s1792, %s1780, 64, 64, 4
        $region72: #{moe_wrapper_forward.1} parent=35 // pred_fallthru
          _
      $region36: #{moe_wrapper_forward.1} parent=5 // pred_fallthru
        _
      %p1800 = scmp.le.s32.totalorder 2, %s31
      // Predicated region
      $region73: #{moe_wrapper_forward.1} parent=5 // pred_check
        %p1801 = pneg %p1800
      $region74: #{moe_wrapper_forward.1} parent=5 // pred_check_branch
        %1803 = sbr.rel (%p1801) target = $region76
      $region75: #{moe_wrapper_forward.1} parent=5 // pred_region
        %s1804 = ssub.s32 %s31, 2
        // Predicated region
        $region77: #{moe_wrapper_forward.1} parent=75 // pred_check
          %p1805 = pneg %p207
        $region78: #{moe_wrapper_forward.1} parent=75 // pred_check_branch
          %1807 = sbr.rel (%p1805) target = $region80
        $region79: #{moe_wrapper_forward.1} parent=75 // pred_region
          %s1808 = sand.u32 %s192, 1
          %s1809 = scalar_lea.sflag [#allocation9], %s1808
          %s1810 = sand.u32 %s192, 1
          %s1811 = smul.addr %s1810, 64
          %s1812 = scalar_lea.vmem [#allocation12], %s1811
          %1813 = dma.done %s1809, 1024
        $region80: #{moe_wrapper_forward.1} parent=75 // pred_fallthru
          _
      $region76: #{moe_wrapper_forward.1} parent=5 // pred_fallthru
        _
    $region6: #{moe_wrapper_forward.1} parent=1 // loop_footer
      %s35 = sadd.s32 1, %s31
    $region7: #{moe_wrapper_forward.1} parent=1 // loop_footer_branch
      %30 = sbr.rel target = $region3
    $region8: #{moe_wrapper_forward.1} parent=1 // loop_exit
      _
    %1814 = vsyncpa [#allocation8], 1
    %s1815 = scalar_lea.sflag [#allocation8], 1
    %1816 = vsyncpa %s1815, 1
    %1817 = vsyncpa [#allocation11], 1
    %s1818 = scalar_lea.sflag [#allocation11], 1
    %1819 = vsyncpa %s1818, 1
    %1820 = vsyncpa [#allocation9], 1
    %s1821 = scalar_lea.sflag [#allocation9], 1
    %1822 = vsyncpa %s1821, 1

</llo_original>
